<compile_context>
chip_gen: v7x
topology: tpu7x:2x2x1
jax: 0.10.0
libtpu: 0.0.40
codegen_flags: <defaults>
</compile_context>

<pallas_src>
import functools

import jax
import jax.numpy as jnp
from jax import lax
from jax.experimental import pallas as pl
from jax.experimental.pallas import tpu as pltpu


# ------------------------- tiling / hardware config -------------------------

def _round_up(x, m):
    return (x + m - 1) // m * m


def _vmem_limit_bytes():
    try:
        cap = pltpu.get_tpu_info().vmem_capacity_bytes
        return int(min(cap * 3 // 4, 96 * 1024 * 1024))
    except Exception:
        return None


_VMEM_LIMIT = _vmem_limit_bytes()

# Double-buffered working set at (1024, 512, 512) bf16 is ~10 MiB, far below
# every chip's VMEM (64-128 MiB) -> no per-chip tile downgrade.
_TM, _TN, _TK = 1024, 512, 512


def _largest_divisor_tile(n, quantum, max_tile):
    """Largest multiple of `quantum` that divides `n` and is <= max_tile.
    Requires n % quantum == 0."""
    t = max(min((max_tile // quantum) * quantum, n), quantum)
    while n % t:
        t -= quantum
    return t


# -------------------- kernel 1: tiled matmul + BN epilogue -------------------
# Used only for the stride != 1 conv1 (im2col path).

def _matmul_bn_kernel(a_ref, w_ref, shift_ref, o_ref, acc_ref, *, relu):
    """out = relu?( A @ W + shift ); K reduction on grid axis 2 (f32 acc)."""
    @pl.when(pl.program_id(2) == 0)
    def _init():
        acc_ref[...] = jnp.zeros_like(acc_ref)

    acc_ref[...] += jnp.dot(a_ref[...], w_ref[...],
                            preferred_element_type=jnp.float32)

    @pl.when(pl.program_id(2) == pl.num_programs(2) - 1)
    def _finalize():
        out = acc_ref[...] + shift_ref[...]
        if relu:
            out = jnp.maximum(out, 0.0)
        o_ref[...] = out.astype(o_ref.dtype)


def fused_matmul_bn(a, w, shift, *, relu, out_dtype=jnp.float32):
    """relu?( A @ W + shift ).  a:[M,K] w:[K,N] (BN scale pre-folded) shift:[1,N]."""
    M, K = a.shape
    K2, N = w.shape
    assert K == K2, (K, K2)

    # K: pad only to 128 and pick tk dividing Kp (no 512-tile over-padding).
    Kp = _round_up(K, 128)
    tk = _largest_divisor_tile(Kp, 128, _TK)
    # M: avoid padding the big A matrix in the common (M % 8 == 0) case.
    Mp = _round_up(M, 8)
    tm = _largest_divisor_tile(Mp, 8, _TM)
    # N: keep the output un-padded (full-dim tile) unless N is large.
    if N <= 512:
        Np, tn = N, N
    else:
        Np = _round_up(N, 128)
        tn = _largest_divisor_tile(Np, 128, _TN)
    # Megacore: prefer >= 2 (i, j) tiles so both v7x TensorCores get work.
    if Mp // tm == 1 and Np // tn == 1 and Mp >= 16:
        tm = _largest_divisor_tile(Mp, 8, max(8, Mp // 2))

    a_p = a.astype(jnp.bfloat16)
    if (Mp, Kp) != (M, K):
        a_p = jnp.pad(a_p, ((0, Mp - M), (0, Kp - K)))
    w_p = w.astype(jnp.bfloat16)
    if (Kp, Np) != (K, N):
        w_p = jnp.pad(w_p, ((0, Kp - K), (0, Np - N)))
    shift_p = shift.astype(jnp.float32)
    if Np != N:
        shift_p = jnp.pad(shift_p, ((0, 0), (0, Np - N)))   # padded cols stay 0

    grid = (Mp // tm, Np // tn, Kp // tk)
    kernel = functools.partial(_matmul_bn_kernel, relu=relu)

    out = pl.pallas_call(
        kernel,
        out_shape=jax.ShapeDtypeStruct((Mp, Np), out_dtype),
        grid_spec=pltpu.PrefetchScalarGridSpec(
            num_scalar_prefetch=0,
            grid=grid,
            in_specs=[
                pl.BlockSpec((tm, tk), lambda i, j, k: (i, k)),
                pl.BlockSpec((tk, tn), lambda i, j, k: (k, j)),
                pl.BlockSpec((1, tn), lambda i, j, k: (0, j)),
            ],
            out_specs=pl.BlockSpec((tm, tn), lambda i, j, k: (i, j)),
            scratch_shapes=[pltpu.VMEM((tm, tn), jnp.float32)],
        ),
        compiler_params=pltpu.CompilerParams(
            dimension_semantics=("parallel", "parallel", "arbitrary"),
            vmem_limit_bytes=_VMEM_LIMIT,
        ),
    )(a_p, w_p, shift_p)
    if (Mp, Np) != (M, N):
        out = out[:M, :N]
    return out


# ---------------- kernel 2: direct 3x3 (stride 1) conv + BN + shortcut -------

def _conv3x3_bn_kernel(x_ref, w_ref, shift_ref, *rest, mode, relu):
    """Direct 3x3 / stride-1 / pad-1 conv over one (padded) NHWC image block.

    x_ref:     (Hp, Wp, Cin)   padded input image (bf16)
    w_ref:     (3, 3, Cin, tn) BN-scale-folded weights (bf16)
    shift_ref: (1, tn)         f32 per-channel shift
    mode == "residual": rest = (res_ref, o_ref)       out += res (identity sc)
    mode == "project":  rest = (xs_ref, wsc_ref, o_ref)  acc starts at xs@wsc
    mode == "none":     rest = (o_ref,)
    """
    o_ref = rest[-1]
    Ho, Wo, tn = o_ref.shape
    cin = x_ref.shape[-1]

    if mode == "project":
        xs_ref, wsc_ref = rest[0], rest[1]
        hs, ws, cs = xs_ref.shape
        acc = jnp.dot(xs_ref[...].reshape(hs * ws, cs), wsc_ref[...],
                      preferred_element_type=jnp.float32)
    else:
        acc = jnp.zeros((Ho * Wo, tn), jnp.float32)

    # Stream the 9 shifted windows straight from the VMEM-resident image
    # (no im2col patch matrix in HBM).
    for kh in range(3):
        for kw in range(3):
            win = x_ref[pl.ds(kh, Ho), pl.ds(kw, Wo), :]
            acc = acc + jnp.dot(win.reshape(Ho * Wo, cin), w_ref[kh, kw],
                                preferred_element_type=jnp.float32)

    out = acc + shift_ref[...]
    if mode == "residual":
        res_ref = rest[0]
        out = out + res_ref[...].reshape(Ho * Wo, tn).astype(jnp.float32)
    if relu:
        out = jnp.maximum(out, 0.0)
    o_ref[...] = out.reshape(Ho, Wo, tn).astype(o_ref.dtype)


def conv3x3_bn_direct(x_nhwc, w_hwio, shift, *, relu, out_dtype,
                      mode="none", residual=None, xs=None, wsc=None):
    """Fused 3x3 stride-1 conv + BN (+shortcut, +relu).  NHWC in / NHWC out."""
    N, H, W, cin = x_nhwc.shape
    cout = w_hwio.shape[-1]
    Ho, Wo = H, W
    Hp, Wp = H + 2, W + 2

    # Spatial halo pad (+2 rows/cols) is the only wrapper-side copy (~1.1x).
    xp = jnp.pad(x_nhwc.astype(jnp.bfloat16), ((0, 0), (1, 1), (1, 1), (0, 0)))
    w = w_hwio.astype(jnp.bfloat16)
    shift = shift.astype(jnp.float32).reshape(1, cout)

    if cout > 512 and cout % 128 == 0:
        tn = _largest_divisor_tile(cout, 128, _TN)
    else:
        tn = cout                               # full dim -> no output padding
    grid = (N, cout // tn)

    in_specs = [
        pl.BlockSpec((None, Hp, Wp, cin), lambda n, j: (n, 0, 0, 0)),
        pl.BlockSpec((3, 3, cin, tn), lambda n, j: (0, 0, 0, j)),
        pl.BlockSpec((1, tn), lambda n, j: (0, j)),
    ]
    operands = [xp, w, shift]
    if mode == "residual":
        in_specs.append(pl.BlockSpec((None, Ho, Wo, tn), lambda n, j: (n, 0, 0, j)))
        operands.append(residual.astype(jnp.bfloat16))
    elif mode == "project":
        cin_s = xs.shape[-1]
        in_specs.append(pl.BlockSpec((None, Ho, Wo, cin_s), lambda n, j: (n, 0, 0, 0)))
        in_specs.append(pl.BlockSpec((cin_s, tn), lambda n, j: (0, j)))
        operands += [xs.astype(jnp.bfloat16), wsc.astype(jnp.bfloat16)]

    kernel = functools.partial(_conv3x3_bn_kernel, mode=mode, relu=relu)
    return pl.pallas_call(
        kernel,
        out_shape=jax.ShapeDtypeStruct((N, Ho, Wo, cout), out_dtype),
        grid_spec=pltpu.PrefetchScalarGridSpec(
            num_scalar_prefetch=0,
            grid=grid,
            in_specs=in_specs,
            out_specs=pl.BlockSpec((None, Ho, Wo, tn), lambda n, j: (n, 0, 0, j)),
        ),
        compiler_params=pltpu.CompilerParams(
            dimension_semantics=("parallel", "parallel"),
            vmem_limit_bytes=_VMEM_LIMIT,
        ),
    )(*operands)


# ------------------------------- glue (JAX) ---------------------------------

def _im2col(x_nhwc, ksize, stride, pad):
    """[N*Ho*Wo, k*k*C] patch matrix (only used for the stride!=1 conv1)."""
    N, H, W, C = x_nhwc.shape
    xp = jnp.pad(x_nhwc, ((0, 0), (pad, pad), (pad, pad), (0, 0)))
    Ho = (H + 2 * pad - ksize) // stride + 1
    Wo = (W + 2 * pad - ksize) // stride + 1
    cols = []
    for kh in range(ksize):
        for kw in range(ksize):
            cols.append(xp[:, kh:kh + stride * Ho:stride,
                           kw:kw + stride * Wo:stride, :])
    patches = jnp.stack(cols, axis=3)          # K ordering = (kh, kw, Cin)
    return patches.reshape(N * Ho * Wo, ksize * ksize * C), (N, Ho, Wo)


def _fold_bn(gamma, beta, mean, var, eps):
    scale = gamma / jnp.sqrt(var + eps)
    shift = beta - mean * scale
    return scale[None, :], shift[None, :]       # [1, C]


def basic_block_forward_nhwc(x_nhwc, params, stride, *,
                             out_dtype=jnp.bfloat16, eps=1e-5):
    """BasicBlock forward, NHWC in / NHWC out (keep NHWC across stacked blocks)."""
    N, H, W, cin = x_nhwc.shape
    cout = params["w1"].shape[0]
    Ho = (H - 1) // stride + 1
    Wo = (W - 1) // stride + 1
    x_bf16 = x_nhwc.astype(jnp.bfloat16)

    s1, b1 = _fold_bn(params["bn1_g"], params["bn1_b"],
                      params["bn1_m"], params["bn1_v"], eps)
    w1_hwio = jnp.transpose(params["w1"], (2, 3, 1, 0)) * s1     # fold BN scale
    s2, b2 = _fold_bn(params["bn2_g"], params["bn2_b"],
                      params["bn2_m"], params["bn2_v"], eps)
    w2_hwio = jnp.transpose(params["w2"], (2, 3, 1, 0)) * s2

    # ---- conv1 + bn1 + relu ----
    if stride == 1:
        out1 = conv3x3_bn_direct(x_bf16, w1_hwio, b1, relu=True,
                                 out_dtype=jnp.bfloat16)
    else:
        # TODO(synk): stream the strided 3x3 patches in-kernel for stride != 1
        # too (strided pl.ds windows) instead of materializing im2col.
        a1, _ = _im2col(x_bf16, ksize=3, stride=stride, pad=1)
        out1 = fused_matmul_bn(a1, w1_hwio.reshape(9 * cin, cout), b1,
                               relu=True, out_dtype=jnp.bfloat16)
        out1 = out1.reshape(N, Ho, Wo, cout)

    # ---- conv2 + bn2 + shortcut(+bn) + relu : ONE fused direct-conv kernel ----
    if stride != 1 or cin != cout:
        ssc, bsc = _fold_bn(params["bnsc_g"], params["bnsc_b"],
                            params["bnsc_m"], params["bnsc_v"], eps)
        wsc = jnp.transpose(params["wsc"][:, :, 0, 0], (1, 0)) * ssc   # [Cin,Cout]
        xs = x_bf16 if stride == 1 else x_bf16[:, ::stride, ::stride, :]
        out2 = conv3x3_bn_direct(out1, w2_hwio, b2 + bsc, relu=True,
                                 out_dtype=out_dtype, mode="project",
                                 xs=xs, wsc=wsc)
    else:
        out2 = conv3x3_bn_direct(out1, w2_hwio, b2, relu=True,
                                 out_dtype=out_dtype, mode="residual",
                                 residual=x_bf16)
    return out2


@functools.partial(jax.jit, static_argnames=("stride",))
def basic_block_forward(x_nchw, params, stride):
    """NCHW / f32 wrapper for parity with the PyTorch module.  When stacking
    blocks, call basic_block_forward_nhwc directly (bf16, no transposes)."""
    x_nhwc = jnp.transpose(x_nchw, (0, 2, 3, 1)).astype(jnp.float32)
    out = basic_block_forward_nhwc(x_nhwc, params, stride, out_dtype=jnp.float32)
    return jnp.transpose(out, (0, 3, 1, 2))


# ---------------------------- pure-JAX reference ----------------------------

def _conv_ref(x, w, stride, pad):
    return lax.conv_general_dilated(
        x, w, (stride, stride), [(pad, pad), (pad, pad)],
        dimension_numbers=("NCHW", "OIHW", "NCHW"),
        precision=lax.Precision.HIGHEST)


def _bn_ref(y, g, b, m, v, eps=1e-5):
    g = g[None, :, None, None]; b = b[None, :, None, None]
    m = m[None, :, None, None]; v = v[None, :, None, None]
    return (y - m) / jnp.sqrt(v + eps) * g + b


def basic_block_reference(x, p, stride):
    out = _conv_ref(x, p["w1"], stride, 1)
    out = jnp.maximum(_bn_ref(out, p["bn1_g"], p["bn1_b"], p["bn1_m"], p["bn1_v"]), 0.0)
    out = _conv_ref(out, p["w2"], 1, 1)
    out = _bn_ref(out, p["bn2_g"], p["bn2_b"], p["bn2_m"], p["bn2_v"])
    cin, cout = x.shape[1], p["w1"].shape[0]
    if stride != 1 or cin != cout:
        sc = _conv_ref(x, p["wsc"], stride, 0)
        sc = _bn_ref(sc, p["bnsc_g"], p["bnsc_b"], p["bnsc_m"], p["bnsc_v"])
    else:
        sc = x
    return jnp.maximum(out + sc, 0.0)


# --------------------------------- main --------------------------------------

def make_params(key, cin, cout):
    ks = jax.random.split(key, 15)
    return {
        "w1":  jax.random.normal(ks[0], (cout, cin, 3, 3), jnp.float32) * 0.1,
        "w2":  jax.random.normal(ks[1], (cout, cout, 3, 3), jnp.float32) * 0.1,
        "wsc": jax.random.normal(ks[2], (cout, cin, 1, 1), jnp.float32) * 0.1,
        "bn1_g":  1.0 + 0.1 * jax.random.normal(ks[3], (cout,), jnp.float32),
        "bn1_b":  0.1 * jax.random.normal(ks[4], (cout,), jnp.float32),
        "bn1_m":  0.1 * jax.random.normal(ks[5], (cout,), jnp.float32),
        "bn1_v":  1.0 + 0.1 * jnp.abs(jax.random.normal(ks[6], (cout,), jnp.float32)),
        "bn2_g":  1.0 + 0.1 * jax.random.normal(ks[7], (cout,), jnp.float32),
        "bn2_b":  0.1 * jax.random.normal(ks[8], (cout,), jnp.float32),
        "bn2_m":  0.1 * jax.random.normal(ks[9], (cout,), jnp.float32),
        "bn2_v":  1.0 + 0.1 * jnp.abs(jax.random.normal(ks[10], (cout,), jnp.float32)),
        "bnsc_g": 1.0 + 0.1 * jax.random.normal(ks[11], (cout,), jnp.float32),
        "bnsc_b": 0.1 * jax.random.normal(ks[12], (cout,), jnp.float32),
        "bnsc_m": 0.1 * jax.random.normal(ks[13], (cout,), jnp.float32),
        "bnsc_v": 1.0 + 0.1 * jnp.abs(jax.random.normal(ks[14], (cout,), jnp.float32)),
    }


if __name__ == "__main__":
    key = jax.random.PRNGKey(0)
    k_x1, k_p1, k_x2, k_p2 = jax.random.split(key, 4)

    # Case 1: projection shortcut (stride=2, Cin != Cout).
    x1 = jax.random.normal(k_x1, (2, 4, 16, 16), jnp.float32)
    p1 = make_params(k_p1, 4, 8)
    out1 = jax.block_until_ready(basic_block_forward(x1, p1, stride=2))
    ref1 = jax.block_until_ready(basic_block_reference(x1, p1, 2))
    assert out1.shape == (2, 8, 8, 8), out1.shape
    assert jnp.allclose(out1, ref1, rtol=5e-2, atol=5e-2), \
        float(jnp.max(jnp.abs(out1 - ref1)))

    # Case 2: identity shortcut (stride=1, Cin == Cout).
    x2 = jax.random.normal(k_x2, (2, 8, 8, 8), jnp.float32)
    p2 = make_params(k_p2, 8, 8)
    out2 = jax.block_until_ready(basic_block_forward(x2, p2, stride=1))
    ref2 = jax.block_until_ready(basic_block_reference(x2, p2, 1))
    assert out2.shape == (2, 8, 8, 8), out2.shape
    assert jnp.allclose(out2, ref2, rtol=5e-2, atol=5e-2), \
        float(jnp.max(jnp.abs(out2 - ref2)))

    print("KERNEL_OK")
</pallas_src>

<mosaic_0001>
module attributes {stable_mosaic.version = 11 : i64} {
  func.func @_matmul_bn_kernel(%arg0: i32, %arg1: i32, %arg2: i32, %arg3: memref<64x128xbf16, #tpu.memory_space<vmem>>, %arg4: memref<128x8xbf16, #tpu.memory_space<vmem>>, %arg5: memref<1x8xf32, #tpu.memory_space<vmem>>, %arg6: memref<64x8xbf16, #tpu.memory_space<vmem>>, %arg7: memref<64x8xf32, #tpu.memory_space<vmem>>) attributes {dimension_semantics = [#tpu.dimension_semantics<parallel>, #tpu.dimension_semantics<parallel>, #tpu.dimension_semantics<arbitrary>], iteration_bounds = array<i64: 2, 1, 1>, scalar_prefetch = 0 : i64, scratch_operands = 1 : i64, tpu.core_type = #tpu.core_type<tc>, window_params = [{transform_indices = @transform_0, window_bounds = array<i64: 64, 128>}, {transform_indices = @transform_1, window_bounds = array<i64: 128, 8>}, {transform_indices = @transform_2, window_bounds = array<i64: 1, 8>}, {transform_indices = @transform_3, window_bounds = array<i64: 64, 8>}]} {
    %c0_i32 = arith.constant 0 : i32
    %0 = arith.cmpi eq, %arg2, %c0_i32 : i32
    %1 = arith.extui %0 : i1 to i32
    %c0_i32_0 = arith.constant 0 : i32
    %2 = arith.cmpi ne, %1, %c0_i32_0 : i32
    scf.if %2 {
      %cst_10 = arith.constant 0.000000e+00 : f32
      %12 = vector.broadcast %cst_10 : f32 to vector<64x8xf32>
      %c0_11 = arith.constant 0 : index
      %c0_12 = arith.constant 0 : index
      %13 = vector.load %arg7[%c0_11, %c0_12] : memref<64x8xf32, #tpu.memory_space<vmem>>, vector<64x8xf32>
      tpu.vector_store %arg7[%c0_11, %c0_12], %12 {strides = array<i32>} : memref<64x8xf32, #tpu.memory_space<vmem>>, vector<64x8xf32>,
    } else {
    }
    %c0 = arith.constant 0 : index
    %c0_1 = arith.constant 0 : index
    %3 = vector.load %arg7[%c0, %c0_1] : memref<64x8xf32, #tpu.memory_space<vmem>>, vector<64x8xf32>
    %c0_2 = arith.constant 0 : index
    %c0_3 = arith.constant 0 : index
    %4 = vector.load %arg3[%c0_2, %c0_3] : memref<64x128xbf16, #tpu.memory_space<vmem>>, vector<64x128xbf16>
    %c0_4 = arith.constant 0 : index
    %c0_5 = arith.constant 0 : index
    %5 = vector.load %arg4[%c0_4, %c0_5] : memref<128x8xbf16, #tpu.memory_space<vmem>>, vector<128x8xbf16>
    %cst = arith.constant dense<0.000000e+00> : vector<64x8xf32>
    %6 = tpu.matmul %4, %5, %cst {dimension_numbers = #tpu.dot_dimension_numbers<[1], [0], [0], [1], [0, 0, 1, 1], [], []>} : vector<64x128xbf16>, vector<128x8xbf16>, vector<64x8xf32> -> vector<64x8xf32>
    %7 = arith.addf %3, %6 : vector<64x8xf32>
    %c0_6 = arith.constant 0 : index
    %c0_7 = arith.constant 0 : index
    %8 = vector.load %arg7[%c0_6, %c0_7] : memref<64x8xf32, #tpu.memory_space<vmem>>, vector<64x8xf32>
    tpu.vector_store %arg7[%c0_6, %c0_7], %7 {strides = array<i32>} : memref<64x8xf32, #tpu.memory_space<vmem>>, vector<64x8xf32>,
    %c0_i32_8 = arith.constant 0 : i32
    %9 = arith.cmpi eq, %arg2, %c0_i32_8 : i32
    %10 = arith.extui %9 : i1 to i32
    %c0_i32_9 = arith.constant 0 : i32
    %11 = arith.cmpi ne, %10, %c0_i32_9 : i32
    scf.if %11 {
      %c0_10 = arith.constant 0 : index
      %c0_11 = arith.constant 0 : index
      %12 = vector.load %arg7[%c0_10, %c0_11] : memref<64x8xf32, #tpu.memory_space<vmem>>, vector<64x8xf32>
      %c0_12 = arith.constant 0 : index
      %c0_13 = arith.constant 0 : index
      %13 = vector.load %arg5[%c0_12, %c0_13] : memref<1x8xf32, #tpu.memory_space<vmem>>, vector<1x8xf32>
      %14 = vector.broadcast %13 : vector<1x8xf32> to vector<64x8xf32>
      %15 = arith.addf %12, %14 : vector<64x8xf32>
      %cst_14 = arith.constant 0.000000e+00 : f32
      %16 = vector.broadcast %cst_14 : f32 to vector<64x8xf32>
      %17 = arith.maximumf %15, %16 : vector<64x8xf32>
      %18 = arith.truncf %17 : vector<64x8xf32> to vector<64x8xbf16>
      %c0_15 = arith.constant 0 : index
      %c0_16 = arith.constant 0 : index
      %19 = vector.load %arg6[%c0_15, %c0_16] : memref<64x8xbf16, #tpu.memory_space<vmem>>, vector<64x8xbf16>
      tpu.vector_store %arg6[%c0_15, %c0_16], %18 {strides = array<i32>} : memref<64x8xbf16, #tpu.memory_space<vmem>>, vector<64x8xbf16>,
    } else {
    }
    return
  }
  func.func @transform_0(%arg0: i32, %arg1: i32, %arg2: i32) -> (i32, i32) {
    %c0_i32 = arith.constant 0 : i32
    return %arg0, %arg2 : i32, i32
  }
  func.func @transform_1(%arg0: i32, %arg1: i32, %arg2: i32) -> (i32, i32) {
    %c0_i32 = arith.constant 0 : i32
    return %arg2, %arg1 : i32, i32
  }
  func.func @transform_2(%arg0: i32, %arg1: i32, %arg2: i32) -> (i32, i32) {
    %c0_i32 = arith.constant 0 : i32
    %c0_i32_0 = arith.constant 0 : i32
    return %c0_i32, %arg1 : i32, i32
  }
  func.func @transform_3(%arg0: i32, %arg1: i32, %arg2: i32) -> (i32, i32) {
    %c0_i32 = arith.constant 0 : i32
    return %arg0, %arg1 : i32, i32
  }
}

module attributes {stable_mosaic.version = 11 : i64} {
  func.func @_conv3x3_bn_kernel(%arg0: i32, %arg1: i32, %arg2: memref<1x10x10x8xbf16, #tpu.memory_space<vmem>>, %arg3: memref<3x3x8x8xbf16, #tpu.memory_space<vmem>>, %arg4: memref<1x8xf32, #tpu.memory_space<vmem>>, %arg5: memref<1x8x8x4xbf16, #tpu.memory_space<vmem>>, %arg6: memref<4x8xbf16, #tpu.memory_space<vmem>>, %arg7: memref<1x8x8x8xf32, #tpu.memory_space<vmem>>) attributes {dimension_semantics = [#tpu.dimension_semantics<parallel>, #tpu.dimension_semantics<parallel>], iteration_bounds = array<i64: 2, 1>, scalar_prefetch = 0 : i64, scratch_operands = 0 : i64, tpu.core_type = #tpu.core_type<tc>, window_params = [{transform_indices = @transform_0, window_bounds = array<i64: 1, 10, 10, 8>}, {transform_indices = @transform_1, window_bounds = array<i64: 3, 3, 8, 8>}, {transform_indices = @transform_2, window_bounds = array<i64: 1, 8>}, {transform_indices = @transform_3, window_bounds = array<i64: 1, 8, 8, 4>}, {transform_indices = @transform_4, window_bounds = array<i64: 4, 8>}, {transform_indices = @transform_5, window_bounds = array<i64: 1, 8, 8, 8>}]} {
    %c0 = arith.constant 0 : index
    %c0_0 = arith.constant 0 : index
    %c0_1 = arith.constant 0 : index
    %c0_2 = arith.constant 0 : index
    %0 = vector.load %arg5[%c0, %c0_0, %c0_1, %c0_2] : memref<1x8x8x4xbf16, #tpu.memory_space<vmem>>, vector<1x8x8x4xbf16>
    %1 = vector.shape_cast %0 : vector<1x8x8x4xbf16> to vector<8x8x4xbf16>
    %2 = vector.shape_cast %1 : vector<8x8x4xbf16> to vector<64x4xbf16>
    %c0_3 = arith.constant 0 : index
    %c0_4 = arith.constant 0 : index
    %3 = vector.load %arg6[%c0_3, %c0_4] : memref<4x8xbf16, #tpu.memory_space<vmem>>, vector<4x8xbf16>
    %cst = arith.constant dense<0.000000e+00> : vector<64x8xf32>
    %4 = tpu.matmul %2, %3, %cst {dimension_numbers = #tpu.dot_dimension_numbers<[1], [0], [0], [1], [0, 0, 1, 1], [], []>} : vector<64x4xbf16>, vector<4x8xbf16>, vector<64x8xf32> -> vector<64x8xf32>
    %c0_5 = arith.constant 0 : index
    %c0_6 = arith.constant 0 : index
    %c0_7 = arith.constant 0 : index
    %c0_8 = arith.constant 0 : index
    %5 = vector.load %arg2[%c0_5, %c0_6, %c0_7, %c0_8] : memref<1x10x10x8xbf16, #tpu.memory_space<vmem>>, vector<1x8x8x8xbf16>
    %6 = vector.shape_cast %5 : vector<1x8x8x8xbf16> to vector<8x8x8xbf16>
    %7 = vector.shape_cast %6 : vector<8x8x8xbf16> to vector<64x8xbf16>
    %c0_9 = arith.constant 0 : index
    %c0_10 = arith.constant 0 : index
    %c0_11 = arith.constant 0 : index
    %c0_12 = arith.constant 0 : index
    %8 = vector.load %arg3[%c0_9, %c0_10, %c0_11, %c0_12] : memref<3x3x8x8xbf16, #tpu.memory_space<vmem>>, vector<1x1x8x8xbf16>
    %9 = vector.shape_cast %8 : vector<1x1x8x8xbf16> to vector<8x8xbf16>
    %cst_13 = arith.constant dense<0.000000e+00> : vector<64x8xf32>
    %10 = tpu.matmul %7, %9, %cst_13 {dimension_numbers = #tpu.dot_dimension_numbers<[1], [0], [0], [1], [0, 0, 1, 1], [], []>} : vector<64x8xbf16>, vector<8x8xbf16>, vector<64x8xf32> -> vector<64x8xf32>
    %11 = arith.addf %4, %10 : vector<64x8xf32>
    %c0_14 = arith.constant 0 : index
    %c0_15 = arith.constant 0 : index
    %c1 = arith.constant 1 : index
    %c0_16 = arith.constant 0 : index
    %12 = vector.load %arg2[%c0_14, %c0_15, %c1, %c0_16] : memref<1x10x10x8xbf16, #tpu.memory_space<vmem>>, vector<1x8x8x8xbf16>
    %13 = vector.shape_cast %12 : vector<1x8x8x8xbf16> to vector<8x8x8xbf16>
    %14 = vector.shape_cast %13 : vector<8x8x8xbf16> to vector<64x8xbf16>
    %c0_17 = arith.constant 0 : index
    %c1_18 = arith.constant 1 : index
    %c0_19 = arith.constant 0 : index
    %c0_20 = arith.constant 0 : index
    %15 = vector.load %arg3[%c0_17, %c1_18, %c0_19, %c0_20] : memref<3x3x8x8xbf16, #tpu.memory_space<vmem>>, vector<1x1x8x8xbf16>
    %16 = vector.shape_cast %15 : vector<1x1x8x8xbf16> to vector<8x8xbf16>
    %cst_21 = arith.constant dense<0.000000e+00> : vector<64x8xf32>
    %17 = tpu.matmul %14, %16, %cst_21 {dimension_numbers = #tpu.dot_dimension_numbers<[1], [0], [0], [1], [0, 0, 1, 1], [], []>} : vector<64x8xbf16>, vector<8x8xbf16>, vector<64x8xf32> -> vector<64x8xf32>
    %18 = arith.addf %11, %17 : vector<64x8xf32>
    %c0_22 = arith.constant 0 : index
    %c0_23 = arith.constant 0 : index
    %c2 = arith.constant 2 : index
    %c0_24 = arith.constant 0 : index
    %19 = vector.load %arg2[%c0_22, %c0_23, %c2, %c0_24] : memref<1x10x10x8xbf16, #tpu.memory_space<vmem>>, vector<1x8x8x8xbf16>
    %20 = vector.shape_cast %19 : vector<1x8x8x8xbf16> to vector<8x8x8xbf16>
    %21 = vector.shape_cast %20 : vector<8x8x8xbf16> to vector<64x8xbf16>
    %c0_25 = arith.constant 0 : index
    %c2_26 = arith.constant 2 : index
    %c0_27 = arith.constant 0 : index
    %c0_28 = arith.constant 0 : index
    %22 = vector.load %arg3[%c0_25, %c2_26, %c0_27, %c0_28] : memref<3x3x8x8xbf16, #tpu.memory_space<vmem>>, vector<1x1x8x8xbf16>
    %23 = vector.shape_cast %22 : vector<1x1x8x8xbf16> to vector<8x8xbf16>
    %cst_29 = arith.constant dense<0.000000e+00> : vector<64x8xf32>
    %24 = tpu.matmul %21, %23, %cst_29 {dimension_numbers = #tpu.dot_dimension_numbers<[1], [0], [0], [1], [0, 0, 1, 1], [], []>} : vector<64x8xbf16>, vector<8x8xbf16>, vector<64x8xf32> -> vector<64x8xf32>
    %25 = arith.addf %18, %24 : vector<64x8xf32>
    %c0_30 = arith.constant 0 : index
    %c1_31 = arith.constant 1 : index
    %c0_32 = arith.constant 0 : index
    %c0_33 = arith.constant 0 : index
    %26 = vector.load %arg2[%c0_30, %c1_31, %c0_32, %c0_33] : memref<1x10x10x8xbf16, #tpu.memory_space<vmem>>, vector<1x8x8x8xbf16>
    %27 = vector.shape_cast %26 : vector<1x8x8x8xbf16> to vector<8x8x8xbf16>
    %28 = vector.shape_cast %27 : vector<8x8x8xbf16> to vector<64x8xbf16>
    %c1_34 = arith.constant 1 : index
    %c0_35 = arith.constant 0 : index
    %c0_36 = arith.constant 0 : index
    %c0_37 = arith.constant 0 : index
    %29 = vector.load %arg3[%c1_34, %c0_35, %c0_36, %c0_37] : memref<3x3x8x8xbf16, #tpu.memory_space<vmem>>, vector<1x1x8x8xbf16>
    %30 = vector.shape_cast %29 : vector<1x1x8x8xbf16> to vector<8x8xbf16>
    %cst_38 = arith.constant dense<0.000000e+00> : vector<64x8xf32>
    %31 = tpu.matmul %28, %30, %cst_38 {dimension_numbers = #tpu.dot_dimension_numbers<[1], [0], [0], [1], [0, 0, 1, 1], [], []>} : vector<64x8xbf16>, vector<8x8xbf16>, vector<64x8xf32> -> vector<64x8xf32>
    %32 = arith.addf %25, %31 : vector<64x8xf32>
    %c0_39 = arith.constant 0 : index
    %c1_40 = arith.constant 1 : index
    %c1_41 = arith.constant 1 : index
    %c0_42 = arith.constant 0 : index
    %33 = vector.load %arg2[%c0_39, %c1_40, %c1_41, %c0_42] : memref<1x10x10x8xbf16, #tpu.memory_space<vmem>>, vector<1x8x8x8xbf16>
    %34 = vector.shape_cast %33 : vector<1x8x8x8xbf16> to vector<8x8x8xbf16>
    %35 = vector.shape_cast %34 : vector<8x8x8xbf16> to vector<64x8xbf16>
    %c1_43 = arith.constant 1 : index
    %c1_44 = arith.constant 1 : index
    %c0_45 = arith.constant 0 : index
    %c0_46 = arith.constant 0 : index
    %36 = vector.load %arg3[%c1_43, %c1_44, %c0_45, %c0_46] : memref<3x3x8x8xbf16, #tpu.memory_space<vmem>>, vector<1x1x8x8xbf16>
    %37 = vector.shape_cast %36 : vector<1x1x8x8xbf16> to vector<8x8xbf16>
    %cst_47 = arith.constant dense<0.000000e+00> : vector<64x8xf32>
    %38 = tpu.matmul %35, %37, %cst_47 {dimension_numbers = #tpu.dot_dimension_numbers<[1], [0], [0], [1], [0, 0, 1, 1], [], []>} : vector<64x8xbf16>, vector<8x8xbf16>, vector<64x8xf32> -> vector<64x8xf32>
    %39 = arith.addf %32, %38 : vector<64x8xf32>
    %c0_48 = arith.constant 0 : index
    %c1_49 = arith.constant 1 : index
    %c2_50 = arith.constant 2 : index
    %c0_51 = arith.constant 0 : index
    %40 = vector.load %arg2[%c0_48, %c1_49, %c2_50, %c0_51] : memref<1x10x10x8xbf16, #tpu.memory_space<vmem>>, vector<1x8x8x8xbf16>
    %41 = vector.shape_cast %40 : vector<1x8x8x8xbf16> to vector<8x8x8xbf16>
    %42 = vector.shape_cast %41 : vector<8x8x8xbf16> to vector<64x8xbf16>
    %c1_52 = arith.constant 1 : index
    %c2_53 = arith.constant 2 : index
    %c0_54 = arith.constant 0 : index
    %c0_55 = arith.constant 0 : index
    %43 = vector.load %arg3[%c1_52, %c2_53, %c0_54, %c0_55] : memref<3x3x8x8xbf16, #tpu.memory_space<vmem>>, vector<1x1x8x8xbf16>
    %44 = vector.shape_cast %43 : vector<1x1x8x8xbf16> to vector<8x8xbf16>
    %cst_56 = arith.constant dense<0.000000e+00> : vector<64x8xf32>
    %45 = tpu.matmul %42, %44, %cst_56 {dimension_numbers = #tpu.dot_dimension_numbers<[1], [0], [0], [1], [0, 0, 1, 1], [], []>} : vector<64x8xbf16>, vector<8x8xbf16>, vector<64x8xf32> -> vector<64x8xf32>
    %46 = arith.addf %39, %45 : vector<64x8xf32>
    %c0_57 = arith.constant 0 : index
    %c2_58 = arith.constant 2 : index
    %c0_59 = arith.constant 0 : index
    %c0_60 = arith.constant 0 : index
    %47 = vector.load %arg2[%c0_57, %c2_58, %c0_59, %c0_60] : memref<1x10x10x8xbf16, #tpu.memory_space<vmem>>, vector<1x8x8x8xbf16>
    %48 = vector.shape_cast %47 : vector<1x8x8x8xbf16> to vector<8x8x8xbf16>
    %49 = vector.shape_cast %48 : vector<8x8x8xbf16> to vector<64x8xbf16>
    %c2_61 = arith.constant 2 : index
    %c0_62 = arith.constant 0 : index
    %c0_63 = arith.constant 0 : index
    %c0_64 = arith.constant 0 : index
    %50 = vector.load %arg3[%c2_61, %c0_62, %c0_63, %c0_64] : memref<3x3x8x8xbf16, #tpu.memory_space<vmem>>, vector<1x1x8x8xbf16>
    %51 = vector.shape_cast %50 : vector<1x1x8x8xbf16> to vector<8x8xbf16>
    %cst_65 = arith.constant dense<0.000000e+00> : vector<64x8xf32>
    %52 = tpu.matmul %49, %51, %cst_65 {dimension_numbers = #tpu.dot_dimension_numbers<[1], [0], [0], [1], [0, 0, 1, 1], [], []>} : vector<64x8xbf16>, vector<8x8xbf16>, vector<64x8xf32> -> vector<64x8xf32>
    %53 = arith.addf %46, %52 : vector<64x8xf32>
    %c0_66 = arith.constant 0 : index
    %c2_67 = arith.constant 2 : index
    %c1_68 = arith.constant 1 : index
    %c0_69 = arith.constant 0 : index
    %54 = vector.load %arg2[%c0_66, %c2_67, %c1_68, %c0_69] : memref<1x10x10x8xbf16, #tpu.memory_space<vmem>>, vector<1x8x8x8xbf16>
    %55 = vector.shape_cast %54 : vector<1x8x8x8xbf16> to vector<8x8x8xbf16>
    %56 = vector.shape_cast %55 : vector<8x8x8xbf16> to vector<64x8xbf16>
    %c2_70 = arith.constant 2 : index
    %c1_71 = arith.constant 1 : index
    %c0_72 = arith.constant 0 : index
    %c0_73 = arith.constant 0 : index
    %57 = vector.load %arg3[%c2_70, %c1_71, %c0_72, %c0_73] : memref<3x3x8x8xbf16, #tpu.memory_space<vmem>>, vector<1x1x8x8xbf16>
    %58 = vector.shape_cast %57 : vector<1x1x8x8xbf16> to vector<8x8xbf16>
    %cst_74 = arith.constant dense<0.000000e+00> : vector<64x8xf32>
    %59 = tpu.matmul %56, %58, %cst_74 {dimension_numbers = #tpu.dot_dimension_numbers<[1], [0], [0], [1], [0, 0, 1, 1], [], []>} : vector<64x8xbf16>, vector<8x8xbf16>, vector<64x8xf32> -> vector<64x8xf32>
    %60 = arith.addf %53, %59 : vector<64x8xf32>
    %c0_75 = arith.constant 0 : index
    %c2_76 = arith.constant 2 : index
    %c2_77 = arith.constant 2 : index
    %c0_78 = arith.constant 0 : index
    %61 = vector.load %arg2[%c0_75, %c2_76, %c2_77, %c0_78] : memref<1x10x10x8xbf16, #tpu.memory_space<vmem>>, vector<1x8x8x8xbf16>
    %62 = vector.shape_cast %61 : vector<1x8x8x8xbf16> to vector<8x8x8xbf16>
    %63 = vector.shape_cast %62 : vector<8x8x8xbf16> to vector<64x8xbf16>
    %c2_79 = arith.constant 2 : index
    %c2_80 = arith.constant 2 : index
    %c0_81 = arith.constant 0 : index
    %c0_82 = arith.constant 0 : index
    %64 = vector.load %arg3[%c2_79, %c2_80, %c0_81, %c0_82] : memref<3x3x8x8xbf16, #tpu.memory_space<vmem>>, vector<1x1x8x8xbf16>
    %65 = vector.shape_cast %64 : vector<1x1x8x8xbf16> to vector<8x8xbf16>
    %cst_83 = arith.constant dense<0.000000e+00> : vector<64x8xf32>
    %66 = tpu.matmul %63, %65, %cst_83 {dimension_numbers = #tpu.dot_dimension_numbers<[1], [0], [0], [1], [0, 0, 1, 1], [], []>} : vector<64x8xbf16>, vector<8x8xbf16>, vector<64x8xf32> -> vector<64x8xf32>
    %67 = arith.addf %60, %66 : vector<64x8xf32>
    %c0_84 = arith.constant 0 : index
    %c0_85 = arith.constant 0 : index
    %68 = vector.load %arg4[%c0_84, %c0_85] : memref<1x8xf32, #tpu.memory_space<vmem>>, vector<1x8xf32>
    %69 = vector.broadcast %68 : vector<1x8xf32> to vector<64x8xf32>
    %70 = arith.addf %67, %69 : vector<64x8xf32>
    %cst_86 = arith.constant 0.000000e+00 : f32
    %71 = vector.broadcast %cst_86 : f32 to vector<64x8xf32>
    %72 = arith.maximumf %70, %71 : vector<64x8xf32>
    %73 = vector.shape_cast %72 : vector<64x8xf32> to vector<8x8x8xf32>
    %c0_87 = arith.constant 0 : index
    %c0_88 = arith.constant 0 : index
    %c0_89 = arith.constant 0 : index
    %c0_90 = arith.constant 0 : index
    %74 = vector.load %arg7[%c0_87, %c0_88, %c0_89, %c0_90] : memref<1x8x8x8xf32, #tpu.memory_space<vmem>>, vector<1x8x8x8xf32>
    %75 = vector.shape_cast %74 : vector<1x8x8x8xf32> to vector<8x8x8xf32>
    %76 = vector.shape_cast %73 : vector<8x8x8xf32> to vector<1x8x8x8xf32>
    tpu.vector_store %arg7[%c0_87, %c0_88, %c0_89, %c0_90], %76 {strides = array<i32>} : memref<1x8x8x8xf32, #tpu.memory_space<vmem>>, vector<1x8x8x8xf32>,
    return
  }
  func.func @transform_0(%arg0: i32, %arg1: i32) -> (i32, i32, i32, i32) {
    %c0_i32 = arith.constant 0 : i32
    %c0_i32_0 = arith.constant 0 : i32
    %c0_i32_1 = arith.constant 0 : i32
    %c0_i32_2 = arith.constant 0 : i32
    return %arg0, %c0_i32, %c0_i32_0, %c0_i32_1 : i32, i32, i32, i32
  }
  func.func @transform_1(%arg0: i32, %arg1: i32) -> (i32, i32, i32, i32) {
    %c0_i32 = arith.constant 0 : i32
    %c0_i32_0 = arith.constant 0 : i32
    %c0_i32_1 = arith.constant 0 : i32
    %c0_i32_2 = arith.constant 0 : i32
    return %c0_i32, %c0_i32_0, %c0_i32_1, %arg1 : i32, i32, i32, i32
  }
  func.func @transform_2(%arg0: i32, %arg1: i32) -> (i32, i32) {
    %c0_i32 = arith.constant 0 : i32
    %c0_i32_0 = arith.constant 0 : i32
    return %c0_i32, %arg1 : i32, i32
  }
  func.func @transform_3(%arg0: i32, %arg1: i32) -> (i32, i32, i32, i32) {
    %c0_i32 = arith.constant 0 : i32
    %c0_i32_0 = arith.constant 0 : i32
    %c0_i32_1 = arith.constant 0 : i32
    %c0_i32_2 = arith.constant 0 : i32
    return %arg0, %c0_i32, %c0_i32_0, %c0_i32_1 : i32, i32, i32, i32
  }
  func.func @transform_4(%arg0: i32, %arg1: i32) -> (i32, i32) {
    %c0_i32 = arith.constant 0 : i32
    %c0_i32_0 = arith.constant 0 : i32
    return %c0_i32, %arg1 : i32, i32
  }
  func.func @transform_5(%arg0: i32, %arg1: i32) -> (i32, i32, i32, i32) {
    %c0_i32 = arith.constant 0 : i32
    %c0_i32_0 = arith.constant 0 : i32
    %c0_i32_1 = arith.constant 0 : i32
    return %arg0, %c0_i32, %c0_i32_0, %arg1 : i32, i32, i32, i32
  }
}

</mosaic_0001>

<llo_original>
// kernel: basic_block_forward.2
$region0: #{basic_block_forward.2}
  #allocation0 [shape = 'u32[]', space=smem, size = 0x4, offset = 0x4, fixed_abs, tag = 'smem constant byte address 0x4 - core index']
  #allocation1 [shape = 'u32[144,128]{1,0:T(1,128)}', space=vmem, size = 0x12000, scoped, tag = 'internal scratch']
  #allocation2 [shape = 'f32[64,8]{1,0:T(8,128)}', space=vmem, size = 0x8000, scoped, tag = 'scratch operand']
  %s0 = inlined_call_operand.vmem [shape: bf16[128,128], index: 0, kind: input, shape index: {}]
  %s1 = inlined_call_operand.vmem [shape: bf16[128,8], index: 1, kind: input, shape index: {}]
  %s2 = inlined_call_operand.vmem [shape: f32[1,8], index: 2, kind: input, shape index: {}]
  %s3 = inlined_call_operand.vmem [shape: bf16[128,8], index: 3, kind: output, shape index: {}]
  %s4 = sld [smem:[#allocation0]]
  $region53: #{basic_block_forward.2} parent=0
    _
  %s6 = ssub.s32 1, %s4
  %s7 = scalar_select 0, %s6, %s4
  loop: start=0, step=1, limit=4
  $region2: #{basic_block_forward.2} parent=0 // loop_pre_header
    _
  $region3: #{basic_block_forward.2} parent=0 // loop_header
    %s9 = sphi 0, %s13
    %p10 = scmp.ge.s32.totalorder %s9, 4
    %s16 = sphi 0, %s35
    %s17 = sphi 0, %s31
    %s18 = sphi 0, %s27
    %s19 = sphi 0, %s16
    %s20 = sphi 0, %s17
    %s21 = sphi 0, %s18
    %s22 = sphi 0, %s19
    %s23 = sphi 0, %s20
    %s24 = sphi 0, %s21
    %s40 = sphi 0, %s42
    %s43 = sphi 0, %s40
    %s44 = sphi 0, %s43
    %s60 = sphi 0, %s44
    %s68 = sphi 0, %s70
    %s71 = sphi 0, %s68
    %s72 = sphi 0, %s71
    %s88 = sphi 0, %s72
    %s94 = sphi 0, %s96
    %s97 = sphi 0, %s94
    %s98 = sphi 0, %s97
    %s114 = sphi 0, %s98
    %s122 = sphi 0, %s124
    %s125 = sphi 0, %s122
    %s126 = sphi 0, %s125
    %s142 = sphi 0, %s126
  $region4: #{basic_block_forward.2} parent=0 // loop_header_branch
    %12 = sbr.rel (%p10) target = $region8
  $region5: #{basic_block_forward.2} parent=0 // loop_body
    %s14 = ssub.s32 %s9, 1
    %s15 = ssub.s32 %s9, 2
    %s25 = sadd.s32 1, %s18
    %p26 = scmp.ge.s32.totalorder %s25, 1
    %s27 = scalar_select %p26, 0, %s25
    %s28 = sadd.s32 1, %s17
    %s29 = scalar_select %p26, %s28, %s17
    %p30 = scmp.ge.s32.totalorder %s29, 1
    %s31 = scalar_select %p30, 0, %s29
    %s32 = sadd.s32 1, %s16
    %s33 = scalar_select %p30, %s32, %s16
    %p34 = scmp.ge.s32.totalorder %s33, 2
    %s35 = scalar_select %p34, 0, %s33
    %s36 = ssub.s32 %s16, %s35
    %s37 = ssub.s32 %s18, %s27
    %s38 = sor.u32 %s36, %s37
    %p39 = scmp.eq.s32.totalorder %s38, 0
    %s41 = sadd.s32 %s40, 1
    %s42 = scalar_select %p39, %s40, %s41
    %p45 = pneg %p39
    %p46 = scmp.eq.s32.totalorder %s9, 1
    %p47 = por %p45, %p46
    %p48 = scmp.ne.s32.totalorder %s40, %s43
    %p49 = scmp.eq.s32.totalorder %s9, 0
    %p50 = por %p48, %p49
    %p51 = scmp.ne.s32.totalorder %s40, %s43
    %p52 = scmp.eq.s32.totalorder %s14, 1
    %p53 = por %p51, %p52
    %p54 = scmp.ne.s32.totalorder %s43, %s44
    %p55 = scmp.eq.s32.totalorder %s14, 0
    %p56 = por %p54, %p55
    %p57 = scmp.ne.s32.totalorder %s43, %s44
    %p58 = scmp.eq.s32.totalorder %s15, 1
    %p59 = por %p57, %p58
    %p61 = scmp.ne.s32.totalorder %s44, %s60
    %p62 = scmp.eq.s32.totalorder %s15, 0
    %p63 = por %p61, %p62
    %s64 = ssub.s32 %s18, %s27
    %s65 = ssub.s32 %s17, %s31
    %s66 = sor.u32 %s64, %s65
    %p67 = scmp.eq.s32.totalorder %s66, 0
    %s69 = sadd.s32 %s68, 1
    %s70 = scalar_select %p67, %s68, %s69
    %p73 = pneg %p67
    %p74 = scmp.eq.s32.totalorder %s9, 1
    %p75 = por %p73, %p74
    %p76 = scmp.ne.s32.totalorder %s68, %s71
    %p77 = scmp.eq.s32.totalorder %s9, 0
    %p78 = por %p76, %p77
    %p79 = scmp.ne.s32.totalorder %s68, %s71
    %p80 = scmp.eq.s32.totalorder %s14, 1
    %p81 = por %p79, %p80
    %p82 = scmp.ne.s32.totalorder %s71, %s72
    %p83 = scmp.eq.s32.totalorder %s14, 0
    %p84 = por %p82, %p83
    %p85 = scmp.ne.s32.totalorder %s71, %s72
    %p86 = scmp.eq.s32.totalorder %s15, 1
    %p87 = por %p85, %p86
    %p89 = scmp.ne.s32.totalorder %s72, %s88
    %p90 = scmp.eq.s32.totalorder %s15, 0
    %p91 = por %p89, %p90
    %s92 = ssub.s32 %s17, %s31
    %p93 = scmp.eq.s32.totalorder %s92, 0
    %s95 = sadd.s32 %s94, 1
    %s96 = scalar_select %p93, %s94, %s95
    %p99 = pneg %p93
    %p100 = scmp.eq.s32.totalorder %s9, 1
    %p101 = por %p99, %p100
    %p102 = scmp.ne.s32.totalorder %s94, %s97
    %p103 = scmp.eq.s32.totalorder %s9, 0
    %p104 = por %p102, %p103
    %p105 = scmp.ne.s32.totalorder %s94, %s97
    %p106 = scmp.eq.s32.totalorder %s14, 1
    %p107 = por %p105, %p106
    %p108 = scmp.ne.s32.totalorder %s97, %s98
    %p109 = scmp.eq.s32.totalorder %s14, 0
    %p110 = por %p108, %p109
    %p111 = scmp.ne.s32.totalorder %s97, %s98
    %p112 = scmp.eq.s32.totalorder %s15, 1
    %p113 = por %p111, %p112
    %p115 = scmp.ne.s32.totalorder %s98, %s114
    %p116 = scmp.eq.s32.totalorder %s15, 0
    %p117 = por %p115, %p116
    %s118 = ssub.s32 %s16, %s35
    %s119 = ssub.s32 %s17, %s31
    %s120 = sor.u32 %s118, %s119
    %p121 = scmp.eq.s32.totalorder %s120, 0
    %s123 = sadd.s32 %s122, 1
    %s124 = scalar_select %p121, %s122, %s123
    %p127 = pneg %p121
    %p128 = scmp.eq.s32.totalorder %s9, 1
    %p129 = por %p127, %p128
    %p130 = scmp.ne.s32.totalorder %s122, %s125
    %p131 = scmp.eq.s32.totalorder %s9, 0
    %p132 = por %p130, %p131
    %p133 = scmp.ne.s32.totalorder %s122, %s125
    %p134 = scmp.eq.s32.totalorder %s14, 1
    %p135 = por %p133, %p134
    %p136 = scmp.ne.s32.totalorder %s125, %s126
    %p137 = scmp.eq.s32.totalorder %s14, 0
    %p138 = por %p136, %p137
    %p139 = scmp.ne.s32.totalorder %s125, %s126
    %p140 = scmp.eq.s32.totalorder %s15, 1
    %p141 = por %p139, %p140
    %p143 = scmp.ne.s32.totalorder %s126, %s142
    %p144 = scmp.eq.s32.totalorder %s15, 0
    %p145 = por %p143, %p144
    %p146 = scmp.le.s32.totalorder 1, %s9
    %p147 = scmp.lt.s32.totalorder %s9, 3
    %p148 = pnand %p146, %p147
    %p149 = pneg %p148
    // Predicated region
    $region9: #{basic_block_forward.2} parent=5 // pred_check
      _
    $region10: #{basic_block_forward.2} parent=5 // pred_check_branch
      %151 = sbr.rel (%p148) target = $region12
    $region11: #{basic_block_forward.2} parent=5 // pred_region
      %s152 = ssub.s32 %s9, 1
      // Predicated region
      $region13: #{basic_block_forward.2} parent=11 // pred_check
        %p153 = pneg %p84
      $region14: #{basic_block_forward.2} parent=11 // pred_check_branch
        %155 = sbr.rel (%p153) target = $region16
      $region15: #{basic_block_forward.2} parent=11 // pred_region
        %s156 = smul.u32 16, %s21
        %p157 = scmp.lt.s32.totalorder %s156, 15
        %s158 = scalar_select %p157, %s156, 15
        %p159 = scmp.lt.s32.totalorder %s20, 0
        %s160 = scalar_select %p159, %s20, 0
        %s161 = sadd.s32 %s160, %s158
        %s162 = smul.addr %s161, 4
        %s163 = scalar_lea.vmem %s1, %s162
        %s164 = smul.u32 16, %s21
      $region16: #{basic_block_forward.2} parent=11 // pred_fallthru
        _
      // Predicated region
      $region17: #{basic_block_forward.2} parent=11 // pred_check
        %p165 = pneg %p110
      $region18: #{basic_block_forward.2} parent=11 // pred_check_branch
        %167 = sbr.rel (%p165) target = $region20
      $region19: #{basic_block_forward.2} parent=11 // pred_region
        %p168 = scmp.lt.s32.totalorder %s20, 0
        %s169 = scalar_select %p168, %s20, 0
        %s170 = scalar_lea.vmem %s2, %s169
      $region20: #{basic_block_forward.2} parent=11 // pred_fallthru
        _
    $region12: #{basic_block_forward.2} parent=5 // pred_fallthru
      _
    %p171 = scmp.lt.s32.totalorder %s9, 2
    // Predicated region
    $region21: #{basic_block_forward.2} parent=5 // pred_check
      %p172 = pneg %p171
    $region22: #{basic_block_forward.2} parent=5 // pred_check_branch
      %174 = sbr.rel (%p172) target = $region24
    $region23: #{basic_block_forward.2} parent=5 // pred_region
      // Predicated region
      $region25: #{basic_block_forward.2} parent=23 // pred_check
        %p175 = pneg %p50
      $region26: #{basic_block_forward.2} parent=23 // pred_check_branch
        %177 = sbr.rel (%p175) target = $region28
      $region27: #{basic_block_forward.2} parent=23 // pred_region
        %s178 = smul.u32 8, %s16
        %p179 = scmp.lt.s32.totalorder %s178, 15
        %s180 = scalar_select %p179, %s178, 15
        %p181 = scmp.lt.s32.totalorder %s18, 0
        %s182 = scalar_select %p181, %s18, 0
        %s183 = sadd.s32 %s182, %s180
        %s184 = smul.addr %s183, 4
        %s185 = scalar_lea.vmem %s0, %s184
        %s186 = smul.u32 8, %s16
      $region28: #{basic_block_forward.2} parent=23 // pred_fallthru
        _
    $region24: #{basic_block_forward.2} parent=5 // pred_fallthru
      _
    %p187 = scmp.le.s32.totalorder 1, %s9
    %p188 = scmp.lt.s32.totalorder %s9, 3
    %p189 = pnand %p187, %p188
    %p190 = pneg %p189
    // Predicated region
    $region29: #{basic_block_forward.2} parent=5 // pred_check
      _
    $region30: #{basic_block_forward.2} parent=5 // pred_check_branch
      %192 = sbr.rel (%p189) target = $region32
    $region31: #{basic_block_forward.2} parent=5 // pred_region
      %s193 = ssub.s32 %s9, 1
      %s194 = smul.u32 8, %s19
      %p195 = scmp.lt.s32.totalorder %s194, 15
      %s196 = scalar_select %p195, %s194, 15
      %p197 = scmp.lt.s32.totalorder %s21, 0
      %s198 = scalar_select %p197, %s21, 0
      %s199 = sadd.s32 %s198, %s196
      %s200 = smul.addr %s199, 4
      %s201 = scalar_lea.vmem %s0, %s200
      %p202 = pneg %p56
      %p203 = pneg %p53
      %s204 = smul.u32 16, %s21
      %p205 = scmp.lt.s32.totalorder %s204, 15
      %s206 = scalar_select %p205, %s204, 15
      %p207 = scmp.lt.s32.totalorder %s20, 0
      %s208 = scalar_select %p207, %s20, 0
      %s209 = sadd.s32 %s208, %s206
      %s210 = smul.addr %s209, 4
      %s211 = scalar_lea.vmem %s1, %s210
      %p212 = pneg %p84
      %p213 = pneg %p81
      %p214 = scmp.lt.s32.totalorder %s20, 0
      %s215 = scalar_select %p214, %s20, 0
      %s216 = scalar_lea.vmem %s2, %s215
      %p217 = pneg %p110
      %p218 = pneg %p107
      %p219 = pneg %p138
      %p220 = pneg %p135
      %s221 = smul.u32 8, %s19
      %p222 = scmp.lt.s32.totalorder %s221, 15
      %s223 = scalar_select %p222, %s221, 15
      %p224 = scmp.lt.s32.totalorder %s20, 0
      %s225 = scalar_select %p224, %s20, 0
      %s226 = sadd.s32 %s225, %s223
      %s227 = smul.addr %s226, 4
      %s228 = scalar_lea.vmem %s3, %s227
      %s229 = smul.u32 8, %s19
      %p230 = scmp.lt.s32.totalorder %s229, 15
      %s231 = scalar_select %p230, %s229, 15
      %p232 = scmp.lt.s32.totalorder %s21, 0
      %s233 = scalar_select %p232, %s21, 0
      %s234 = sadd.s32 %s233, %s231
      %s235 = smul.addr %s234, 4
      %s236 = scalar_lea.vmem %s0, %s235
      %s237 = smul.u32 8, %s19
      %s238 = smul.u32 16, %s21
      %p239 = scmp.lt.s32.totalorder %s238, 15
      %s240 = scalar_select %p239, %s238, 15
      %p241 = scmp.lt.s32.totalorder %s20, 0
      %s242 = scalar_select %p241, %s20, 0
      %s243 = sadd.s32 %s242, %s240
      %s244 = smul.addr %s243, 4
      %s245 = scalar_lea.vmem %s1, %s244
      %s246 = smul.u32 16, %s21
      %p247 = scmp.lt.s32.totalorder %s20, 0
      %s248 = scalar_select %p247, %s20, 0
      %s249 = scalar_lea.vmem %s2, %s248
      %s250 = smul.u32 8, %s19
      %p251 = scmp.lt.s32.totalorder %s250, 15
      %s252 = scalar_select %p251, %s250, 15
      %p253 = scmp.lt.s32.totalorder %s20, 0
      %s254 = scalar_select %p253, %s20, 0
      %s255 = sadd.s32 %s254, %s252
      %s256 = smul.addr %s255, 4
      %s257 = scalar_lea.vmem %s3, %s256
      %s258 = smul.u32 8, %s19
      %p260 = scmp.eq.s32.totalorder %s21, 0
      // Predicated region
      $region33: #{basic_block_forward.2} parent=31 // pred_check
        %p261 = pneg %p260
      $region34: #{basic_block_forward.2} parent=31 // pred_check_branch
        %263 = sbr.rel (%p261) target = $region36
      $region35: #{basic_block_forward.2} parent=31 // pred_region
        %vm264 = vcmask 64512
        %265 = vst.msk [vmem:[#allocation2] sm:$0xff] %vm264, 0.0
        %266 = vst.msk [vmem:[#allocation2 + $0x8] sm:$0xff] %vm264, 0.0
        %267 = vst.msk [vmem:[#allocation2 + $0x10] sm:$0xff] %vm264, 0.0
        %268 = vst.msk [vmem:[#allocation2 + $0x18] sm:$0xff] %vm264, 0.0
        %269 = vst.msk [vmem:[#allocation2 + $0x20] sm:$0xff] %vm264, 0.0
        %270 = vst.msk [vmem:[#allocation2 + $0x28] sm:$0xff] %vm264, 0.0
        %271 = vst.msk [vmem:[#allocation2 + $0x30] sm:$0xff] %vm264, 0.0
        %272 = vst.msk [vmem:[#allocation2 + $0x38] sm:$0xff] %vm264, 0.0
      $region36: #{basic_block_forward.2} parent=31 // pred_fallthru
        _
      %v273 = vld [vmem:[#allocation2] sm:$0xff]
      %v274 = vld [vmem:[#allocation2 + $0x8] sm:$0xff]
      %v275 = vld [vmem:[#allocation2 + $0x10] sm:$0xff]
      %v276 = vld [vmem:[#allocation2 + $0x18] sm:$0xff]
      %v277 = vld [vmem:[#allocation2 + $0x20] sm:$0xff]
      %v278 = vld [vmem:[#allocation2 + $0x28] sm:$0xff]
      %v279 = vld [vmem:[#allocation2 + $0x30] sm:$0xff]
      %v280 = vld [vmem:[#allocation2 + $0x38] sm:$0xff]
      %v281 = vld [vmem:[%s236] sm:$0xf]
      %v282 = vld [vmem:[%s236 + $0x4] sm:$0xf]
      %v283 = vld [vmem:[%s236 + $0x8] sm:$0xf]
      %v284 = vld [vmem:[%s236 + $0xc] sm:$0xf]
      %v285 = vld [vmem:[%s236 + $0x10] sm:$0xf]
      %v286 = vld [vmem:[%s236 + $0x14] sm:$0xf]
      %v287 = vld [vmem:[%s236 + $0x18] sm:$0xf]
      %v288 = vld [vmem:[%s236 + $0x1c] sm:$0xf]
      %v289 = vld [vmem:[%s245] sm:$0xf]
      %v290 = vld [vmem:[%s245 + $0x4] sm:$0xf]
      %v291 = vld [vmem:[%s245 + $0x8] sm:$0xf]
      %v292 = vld [vmem:[%s245 + $0xc] sm:$0xf]
      %v293 = vld [vmem:[%s245 + $0x10] sm:$0xf]
      %v294 = vld [vmem:[%s245 + $0x14] sm:$0xf]
      %v295 = vld [vmem:[%s245 + $0x18] sm:$0xf]
      %v296 = vld [vmem:[%s245 + $0x1c] sm:$0xf]
      %v297 = vld [vmem:[%s245 + $0x20] sm:$0xf]
      %v298 = vld [vmem:[%s245 + $0x24] sm:$0xf]
      %v299 = vld [vmem:[%s245 + $0x28] sm:$0xf]
      %v300 = vld [vmem:[%s245 + $0x2c] sm:$0xf]
      %v301 = vld [vmem:[%s245 + $0x30] sm:$0xf]
      %v302 = vld [vmem:[%s245 + $0x34] sm:$0xf]
      %v303 = vld [vmem:[%s245 + $0x38] sm:$0xf]
      %v304 = vld [vmem:[%s245 + $0x3c] sm:$0xf]
      %v313 = vunpack.c.l.b16 %v281
      %v314 = vunpack.c.l.b16 %v282
      %v315 = vunpack.c.l.b16 %v283
      %v316 = vunpack.c.l.b16 %v284
      %v317 = vunpack.c.l.b16 %v285
      %v318 = vunpack.c.l.b16 %v286
      %v319 = vunpack.c.l.b16 %v287
      %v320 = vunpack.c.l.b16 %v288
      %v321 = vpack.c.b16 %v314, %v313
      %v322 = vpack.c.b16 %v316, %v315
      %v323 = vpack.c.b16 %v318, %v317
      %v324 = vpack.c.b16 %v320, %v319
      %v345 = vunpack.c.l.b16 %v289
      %v346 = vunpack.c.l.b16 %v290
      %v347 = vunpack.c.l.b16 %v291
      %v348 = vunpack.c.l.b16 %v292
      %v349 = vunpack.c.l.b16 %v293
      %v350 = vunpack.c.l.b16 %v294
      %v351 = vunpack.c.l.b16 %v295
      %v352 = vunpack.c.l.b16 %v296
      %v353 = vunpack.c.l.b16 %v297
      %v354 = vunpack.c.l.b16 %v298
      %v355 = vunpack.c.l.b16 %v299
      %v356 = vunpack.c.l.b16 %v300
      %v357 = vunpack.c.l.b16 %v301
      %v358 = vunpack.c.l.b16 %v302
      %v359 = vunpack.c.l.b16 %v303
      %v360 = vunpack.c.l.b16 %v304
      %v361 = vpack.c.b16 %v346, %v345
      %v362 = vpack.c.b16 %v348, %v347
      %v363 = vpack.c.b16 %v350, %v349
      %v364 = vpack.c.b16 %v352, %v351
      %v365 = vpack.c.b16 %v354, %v353
      %v366 = vpack.c.b16 %v356, %v355
      %v367 = vpack.c.b16 %v358, %v357
      %v368 = vpack.c.b16 %v360, %v359
      %377 = vmatprep.subr.bf16.mxu0 0
      %378 = vmatpush1.bf16.msra.mxu0 %v361
      %379 = vmatprep.subr.bf16.mxu0 0
      %380 = vmatpush1.bf16.msra.mxu0 %v362
      %381 = vmatprep.subr.bf16.mxu0 0
      %382 = vmatpush1.bf16.msra.mxu0 %v363
      %383 = vmatprep.subr.bf16.mxu0 0
      %384 = vmatpush1.bf16.msra.mxu0 %v364
      %385 = vmatprep.subr.bf16.mxu0 0
      %386 = vmatpush1.bf16.msra.mxu0 %v365
      %387 = vmatprep.subr.bf16.mxu0 0
      %388 = vmatpush1.bf16.msra.mxu0 %v366
      %389 = vmatprep.subr.bf16.mxu0 0
      %390 = vmatpush1.bf16.msra.mxu0 %v367
      %391 = vmatprep.subr.bf16.mxu0 0
      %392 = vmatpush1.bf16.msra.mxu0 %v368
      %393 = vmatprep.subr.bf16.mxu0 0
      %394 = vmatpush1.bf16.msra.mxu0 0
      %395 = vmatprep.subr.bf16.mxu0 0
      %396 = vmatpush1.bf16.msra.mxu0 0
      %397 = vmatprep.subr.bf16.mxu0 0
      %398 = vmatpush1.bf16.msra.mxu0 0
      %399 = vmatprep.subr.bf16.mxu0 0
      %400 = vmatpush1.bf16.msra.mxu0 0
      %401 = vmatprep.subr.bf16.mxu0 0
      %402 = vmatpush1.bf16.msra.mxu0 0
      %403 = vmatprep.subr.bf16.mxu0 0
      %404 = vmatpush1.bf16.msra.mxu0 0
      %405 = vmatprep.subr.bf16.mxu0 0
      %406 = vmatpush1.bf16.msra.mxu0 0
      %407 = vmatprep.subr.bf16.mxu0 0
      %408 = vmatpush1.bf16.msra.mxu0 0
      %409 = vmatprep.mubr.bf16.mxu0 0
      %410 = vmatmul.mubr.bf16.gmra.mrb[0].mxu0 %v321
      %v411 = vpop.f32.mrb[0].mxu0
      %v412 = vadd.f32 0.0, %v411
      %v413 = vpop.f32.mrb[0].mxu0
      %v414 = vpop.f32.mrb[0].mxu0
      %v415 = vadd.f32 0.0, %v414
      %v416 = vpop.f32.mrb[0].mxu0
      %417 = vmatprep.mubr.bf16.mxu0 0
      %418 = vmatmul.mubr.bf16.gmra.mrb[0].mxu0 %v322
      %v419 = vpop.f32.mrb[0].mxu0
      %v420 = vadd.f32 0.0, %v419
      %v421 = vpop.f32.mrb[0].mxu0
      %v422 = vpop.f32.mrb[0].mxu0
      %v423 = vadd.f32 0.0, %v422
      %v424 = vpop.f32.mrb[0].mxu0
      %425 = vmatprep.mubr.bf16.mxu0 0
      %426 = vmatmul.mubr.bf16.gmra.mrb[0].mxu0 %v323
      %v427 = vpop.f32.mrb[0].mxu0
      %v428 = vadd.f32 0.0, %v427
      %v429 = vpop.f32.mrb[0].mxu0
      %v430 = vpop.f32.mrb[0].mxu0
      %v431 = vadd.f32 0.0, %v430
      %v432 = vpop.f32.mrb[0].mxu0
      %433 = vmatprep.mubr.bf16.mxu0 0
      %434 = vmatmul.mubr.bf16.gmra.mrb[0].mxu0 %v324
      %v435 = vpop.f32.mrb[0].mxu0
      %v436 = vadd.f32 0.0, %v435
      %v437 = vpop.f32.mrb[0].mxu0
      %v438 = vpop.f32.mrb[0].mxu0
      %v439 = vadd.f32 0.0, %v438
      %v440 = vpop.f32.mrb[0].mxu0
      %441 = vdwg.mxu0
      %v442 = vadd.f32 %v273, %v412
      %v443 = vadd.f32 %v274, %v415
      %v444 = vadd.f32 %v275, %v420
      %v445 = vadd.f32 %v276, %v423
      %v446 = vadd.f32 %v277, %v428
      %v447 = vadd.f32 %v278, %v431
      %v448 = vadd.f32 %v279, %v436
      %v449 = vadd.f32 %v280, %v439
      %vm450 = vcmask 64512
      %451 = vst.msk [vmem:[#allocation2] sm:$0xff] %vm450, %v442
      %452 = vst.msk [vmem:[#allocation2 + $0x8] sm:$0xff] %vm450, %v443
      %453 = vst.msk [vmem:[#allocation2 + $0x10] sm:$0xff] %vm450, %v444
      %454 = vst.msk [vmem:[#allocation2 + $0x18] sm:$0xff] %vm450, %v445
      %455 = vst.msk [vmem:[#allocation2 + $0x20] sm:$0xff] %vm450, %v446
      %456 = vst.msk [vmem:[#allocation2 + $0x28] sm:$0xff] %vm450, %v447
      %457 = vst.msk [vmem:[#allocation2 + $0x30] sm:$0xff] %vm450, %v448
      %458 = vst.msk [vmem:[#allocation2 + $0x38] sm:$0xff] %vm450, %v449
      // Predicated region
      $region37: #{basic_block_forward.2} parent=31 // pred_check
        %p459 = pneg %p260
      $region38: #{basic_block_forward.2} parent=31 // pred_check_branch
        %461 = sbr.rel (%p459) target = $region40
      $region39: #{basic_block_forward.2} parent=31 // pred_region
        %v462 = vld [vmem:[#allocation2] sm:$0xff]
        %v463 = vld [vmem:[#allocation2 + $0x8] sm:$0xff]
        %v464 = vld [vmem:[#allocation2 + $0x10] sm:$0xff]
        %v465 = vld [vmem:[#allocation2 + $0x18] sm:$0xff]
        %v466 = vld [vmem:[#allocation2 + $0x20] sm:$0xff]
        %v467 = vld [vmem:[#allocation2 + $0x28] sm:$0xff]
        %v468 = vld [vmem:[#allocation2 + $0x30] sm:$0xff]
        %v469 = vld [vmem:[#allocation2 + $0x38] sm:$0xff]
        %v470 = vld [vmem:[%s249] sm:$0x1]
        %v472 = vlaneseq
        %v473 = vshrl.u32 %v472, 7
        %v474 = vsub.s32 0, %v473
        %v475 = vrot.slane %v470, %v474
        %v477 = vadd.f32 %v462, %v475
        %v478 = vadd.f32 %v463, %v475
        %v479 = vadd.f32 %v464, %v475
        %v480 = vadd.f32 %v465, %v475
        %v481 = vadd.f32 %v466, %v475
        %v482 = vadd.f32 %v467, %v475
        %v483 = vadd.f32 %v468, %v475
        %v484 = vadd.f32 %v469, %v475
        %v485 = vmax.f32 %v477, 0.0
        %v486 = vmax.f32 %v478, 0.0
        %v487 = vmax.f32 %v479, 0.0
        %v488 = vmax.f32 %v480, 0.0
        %v489 = vmax.f32 %v481, 0.0
        %v490 = vmax.f32 %v482, 0.0
        %v491 = vmax.f32 %v483, 0.0
        %v492 = vmax.f32 %v484, 0.0
        %v493 = vpack.c.bf16 %v486, %v485
        %v494 = vpack.c.bf16 %v488, %v487
        %v495 = vpack.c.bf16 %v490, %v489
        %v496 = vpack.c.bf16 %v492, %v491
        %v501 = vunpack.c.l.b16 %v493
        %v502 = vunpack.c.h.b16 %v493
        %v503 = vunpack.c.l.b16 %v494
        %v504 = vunpack.c.h.b16 %v494
        %v505 = vunpack.c.l.b16 %v495
        %v506 = vunpack.c.h.b16 %v495
        %v507 = vunpack.c.l.b16 %v496
        %v508 = vunpack.c.h.b16 %v496
        %v509 = vpack.c.b16 %v501, %v501
        %v510 = vpack.c.b16 %v502, %v502
        %v511 = vpack.c.b16 %v503, %v503
        %v512 = vpack.c.b16 %v504, %v504
        %v513 = vpack.c.b16 %v505, %v505
        %v514 = vpack.c.b16 %v506, %v506
        %v515 = vpack.c.b16 %v507, %v507
        %v516 = vpack.c.b16 %v508, %v508
        %vm525 = vcmask 60416
        %526 = vst.msk [vmem:[%s257] sm:$0xf] %vm525, %v509
        %527 = vst.msk [vmem:[%s257 + $0x4] sm:$0xf] %vm525, %v510
        %528 = vst.msk [vmem:[%s257 + $0x8] sm:$0xf] %vm525, %v511
        %529 = vst.msk [vmem:[%s257 + $0xc] sm:$0xf] %vm525, %v512
        %530 = vst.msk [vmem:[%s257 + $0x10] sm:$0xf] %vm525, %v513
        %531 = vst.msk [vmem:[%s257 + $0x14] sm:$0xf] %vm525, %v514
        %532 = vst.msk [vmem:[%s257 + $0x18] sm:$0xf] %vm525, %v515
        %533 = vst.msk [vmem:[%s257 + $0x1c] sm:$0xf] %vm525, %v516
      $region40: #{basic_block_forward.2} parent=31 // pred_fallthru
        _
      %s534 = smul.u32 8, %s19
      %p535 = scmp.lt.s32.totalorder %s534, 15
      %s536 = scalar_select %p535, %s534, 15
      %p537 = scmp.lt.s32.totalorder %s20, 0
      %s538 = scalar_select %p537, %s20, 0
      %s539 = sadd.s32 %s538, %s536
      %s540 = smul.addr %s539, 4
      %s541 = scalar_lea.vmem %s3, %s540
      // Predicated region
      $region41: #{basic_block_forward.2} parent=31 // pred_check
        %p542 = pneg %p135
      $region42: #{basic_block_forward.2} parent=31 // pred_check_branch
        %544 = sbr.rel (%p542) target = $region44
      $region43: #{basic_block_forward.2} parent=31 // pred_region
        %s545 = smul.u32 8, %s19
      $region44: #{basic_block_forward.2} parent=31 // pred_fallthru
        _
    $region32: #{basic_block_forward.2} parent=5 // pred_fallthru
      _
    %p546 = scmp.le.s32.totalorder 2, %s9
    // Predicated region
    $region45: #{basic_block_forward.2} parent=5 // pred_check
      %p547 = pneg %p546
    $region46: #{basic_block_forward.2} parent=5 // pred_check_branch
      %549 = sbr.rel (%p547) target = $region48
    $region47: #{basic_block_forward.2} parent=5 // pred_region
      %s550 = ssub.s32 %s9, 2
      // Predicated region
      $region49: #{basic_block_forward.2} parent=47 // pred_check
        %p551 = pneg %p141
      $region50: #{basic_block_forward.2} parent=47 // pred_check_branch
        %553 = sbr.rel (%p551) target = $region52
      $region51: #{basic_block_forward.2} parent=47 // pred_region
        %s554 = smul.u32 8, %s22
        %p555 = scmp.lt.s32.totalorder %s554, 15
        %s556 = scalar_select %p555, %s554, 15
        %p557 = scmp.lt.s32.totalorder %s23, 0
        %s558 = scalar_select %p557, %s23, 0
        %s559 = sadd.s32 %s558, %s556
        %s560 = smul.addr %s559, 4
        %s561 = scalar_lea.vmem %s3, %s560
      $region52: #{basic_block_forward.2} parent=47 // pred_fallthru
        _
    $region48: #{basic_block_forward.2} parent=5 // pred_fallthru
      _
  $region6: #{basic_block_forward.2} parent=0 // loop_footer
    %s13 = sadd.s32 1, %s9
  $region7: #{basic_block_forward.2} parent=0 // loop_footer_branch
    %8 = sbr.rel target = $region3
  $region8: #{basic_block_forward.2} parent=0 // loop_exit
    _

// kernel: basic_block_forward.3
$region0: #{basic_block_forward.3}
  #allocation0 [shape = 'u32[]', space=smem, size = 0x4, offset = 0x4, fixed_abs, tag = 'smem constant byte address 0x4 - core index']
  #allocation1 [shape = 'u32[144,128]{1,0:T(1,128)}', space=vmem, size = 0x12000, scoped, tag = 'internal scratch']
  %s0 = inlined_call_operand.vmem [shape: bf16[2,10,10,8], index: 0, kind: input, shape index: {}]
  %s1 = inlined_call_operand.vmem [shape: bf16[3,3,8,8], index: 1, kind: input, shape index: {}]
  %s2 = inlined_call_operand.vmem [shape: f32[1,8], index: 2, kind: input, shape index: {}]
  %s3 = inlined_call_operand.vmem [shape: bf16[2,8,8,4], index: 3, kind: input, shape index: {}]
  %s4 = inlined_call_operand.vmem [shape: bf16[4,8], index: 4, kind: input, shape index: {}]
  %s5 = inlined_call_operand.vmem [shape: f32[2,8,8,8], index: 5, kind: output, shape index: {}]
  %s6 = sld [smem:[#allocation0]]
  $region53: #{basic_block_forward.3} parent=0
    _
  %s8 = ssub.s32 1, %s6
  %s9 = scalar_select 0, %s8, %s6
  loop: start=0, step=1, limit=4
  $region2: #{basic_block_forward.3} parent=0 // loop_pre_header
    _
  $region3: #{basic_block_forward.3} parent=0 // loop_header
    %s11 = sphi 0, %s15
    %p12 = scmp.ge.s32.totalorder %s11, 4
    %s18 = sphi 0, %s30
    %s19 = sphi 0, %s26
    %s20 = sphi 0, %s18
    %s21 = sphi 0, %s19
    %s22 = sphi 0, %s20
    %s23 = sphi 0, %s21
    %s33 = sphi 0, %s35
    %s36 = sphi 0, %s33
    %s37 = sphi 0, %s36
    %s53 = sphi 0, %s37
    %s59 = sphi 0, %s61
    %s62 = sphi 0, %s59
    %s63 = sphi 0, %s62
    %s79 = sphi 0, %s63
    %s85 = sphi 0, %s87
    %s88 = sphi 0, %s85
    %s89 = sphi 0, %s88
    %s105 = sphi 0, %s89
    %s111 = sphi 0, %s113
    %s114 = sphi 0, %s111
    %s115 = sphi 0, %s114
    %s131 = sphi 0, %s115
    %s137 = sphi 0, %s139
    %s140 = sphi 0, %s137
    %s141 = sphi 0, %s140
    %s157 = sphi 0, %s141
    %s165 = sphi 0, %s167
    %s168 = sphi 0, %s165
    %s169 = sphi 0, %s168
    %s185 = sphi 0, %s169
  $region4: #{basic_block_forward.3} parent=0 // loop_header_branch
    %14 = sbr.rel (%p12) target = $region8
  $region5: #{basic_block_forward.3} parent=0 // loop_body
    %s16 = ssub.s32 %s11, 1
    %s17 = ssub.s32 %s11, 2
    %s24 = sadd.s32 1, %s19
    %p25 = scmp.ge.s32.totalorder %s24, 1
    %s26 = scalar_select %p25, 0, %s24
    %s27 = sadd.s32 1, %s18
    %s28 = scalar_select %p25, %s27, %s18
    %p29 = scmp.ge.s32.totalorder %s28, 2
    %s30 = scalar_select %p29, 0, %s28
    %s31 = ssub.s32 %s18, %s30
    %p32 = scmp.eq.s32.totalorder %s31, 0
    %s34 = sadd.s32 %s33, 1
    %s35 = scalar_select %p32, %s33, %s34
    %p38 = pneg %p32
    %p39 = scmp.eq.s32.totalorder %s11, 1
    %p40 = por %p38, %p39
    %p41 = scmp.ne.s32.totalorder %s33, %s36
    %p42 = scmp.eq.s32.totalorder %s11, 0
    %p43 = por %p41, %p42
    %p44 = scmp.ne.s32.totalorder %s33, %s36
    %p45 = scmp.eq.s32.totalorder %s16, 1
    %p46 = por %p44, %p45
    %p47 = scmp.ne.s32.totalorder %s36, %s37
    %p48 = scmp.eq.s32.totalorder %s16, 0
    %p49 = por %p47, %p48
    %p50 = scmp.ne.s32.totalorder %s36, %s37
    %p51 = scmp.eq.s32.totalorder %s17, 1
    %p52 = por %p50, %p51
    %p54 = scmp.ne.s32.totalorder %s37, %s53
    %p55 = scmp.eq.s32.totalorder %s17, 0
    %p56 = por %p54, %p55
    %s57 = ssub.s32 %s19, %s26
    %p58 = scmp.eq.s32.totalorder %s57, 0
    %s60 = sadd.s32 %s59, 1
    %s61 = scalar_select %p58, %s59, %s60
    %p64 = pneg %p58
    %p65 = scmp.eq.s32.totalorder %s11, 1
    %p66 = por %p64, %p65
    %p67 = scmp.ne.s32.totalorder %s59, %s62
    %p68 = scmp.eq.s32.totalorder %s11, 0
    %p69 = por %p67, %p68
    %p70 = scmp.ne.s32.totalorder %s59, %s62
    %p71 = scmp.eq.s32.totalorder %s16, 1
    %p72 = por %p70, %p71
    %p73 = scmp.ne.s32.totalorder %s62, %s63
    %p74 = scmp.eq.s32.totalorder %s16, 0
    %p75 = por %p73, %p74
    %p76 = scmp.ne.s32.totalorder %s62, %s63
    %p77 = scmp.eq.s32.totalorder %s17, 1
    %p78 = por %p76, %p77
    %p80 = scmp.ne.s32.totalorder %s63, %s79
    %p81 = scmp.eq.s32.totalorder %s17, 0
    %p82 = por %p80, %p81
    %s83 = ssub.s32 %s19, %s26
    %p84 = scmp.eq.s32.totalorder %s83, 0
    %s86 = sadd.s32 %s85, 1
    %s87 = scalar_select %p84, %s85, %s86
    %p90 = pneg %p84
    %p91 = scmp.eq.s32.totalorder %s11, 1
    %p92 = por %p90, %p91
    %p93 = scmp.ne.s32.totalorder %s85, %s88
    %p94 = scmp.eq.s32.totalorder %s11, 0
    %p95 = por %p93, %p94
    %p96 = scmp.ne.s32.totalorder %s85, %s88
    %p97 = scmp.eq.s32.totalorder %s16, 1
    %p98 = por %p96, %p97
    %p99 = scmp.ne.s32.totalorder %s88, %s89
    %p100 = scmp.eq.s32.totalorder %s16, 0
    %p101 = por %p99, %p100
    %p102 = scmp.ne.s32.totalorder %s88, %s89
    %p103 = scmp.eq.s32.totalorder %s17, 1
    %p104 = por %p102, %p103
    %p106 = scmp.ne.s32.totalorder %s89, %s105
    %p107 = scmp.eq.s32.totalorder %s17, 0
    %p108 = por %p106, %p107
    %s109 = ssub.s32 %s18, %s30
    %p110 = scmp.eq.s32.totalorder %s109, 0
    %s112 = sadd.s32 %s111, 1
    %s113 = scalar_select %p110, %s111, %s112
    %p116 = pneg %p110
    %p117 = scmp.eq.s32.totalorder %s11, 1
    %p118 = por %p116, %p117
    %p119 = scmp.ne.s32.totalorder %s111, %s114
    %p120 = scmp.eq.s32.totalorder %s11, 0
    %p121 = por %p119, %p120
    %p122 = scmp.ne.s32.totalorder %s111, %s114
    %p123 = scmp.eq.s32.totalorder %s16, 1
    %p124 = por %p122, %p123
    %p125 = scmp.ne.s32.totalorder %s114, %s115
    %p126 = scmp.eq.s32.totalorder %s16, 0
    %p127 = por %p125, %p126
    %p128 = scmp.ne.s32.totalorder %s114, %s115
    %p129 = scmp.eq.s32.totalorder %s17, 1
    %p130 = por %p128, %p129
    %p132 = scmp.ne.s32.totalorder %s115, %s131
    %p133 = scmp.eq.s32.totalorder %s17, 0
    %p134 = por %p132, %p133
    %s135 = ssub.s32 %s19, %s26
    %p136 = scmp.eq.s32.totalorder %s135, 0
    %s138 = sadd.s32 %s137, 1
    %s139 = scalar_select %p136, %s137, %s138
    %p142 = pneg %p136
    %p143 = scmp.eq.s32.totalorder %s11, 1
    %p144 = por %p142, %p143
    %p145 = scmp.ne.s32.totalorder %s137, %s140
    %p146 = scmp.eq.s32.totalorder %s11, 0
    %p147 = por %p145, %p146
    %p148 = scmp.ne.s32.totalorder %s137, %s140
    %p149 = scmp.eq.s32.totalorder %s16, 1
    %p150 = por %p148, %p149
    %p151 = scmp.ne.s32.totalorder %s140, %s141
    %p152 = scmp.eq.s32.totalorder %s16, 0
    %p153 = por %p151, %p152
    %p154 = scmp.ne.s32.totalorder %s140, %s141
    %p155 = scmp.eq.s32.totalorder %s17, 1
    %p156 = por %p154, %p155
    %p158 = scmp.ne.s32.totalorder %s141, %s157
    %p159 = scmp.eq.s32.totalorder %s17, 0
    %p160 = por %p158, %p159
    %s161 = ssub.s32 %s18, %s30
    %s162 = ssub.s32 %s19, %s26
    %s163 = sor.u32 %s161, %s162
    %p164 = scmp.eq.s32.totalorder %s163, 0
    %s166 = sadd.s32 %s165, 1
    %s167 = scalar_select %p164, %s165, %s166
    %p170 = pneg %p164
    %p171 = scmp.eq.s32.totalorder %s11, 1
    %p172 = por %p170, %p171
    %p173 = scmp.ne.s32.totalorder %s165, %s168
    %p174 = scmp.eq.s32.totalorder %s11, 0
    %p175 = por %p173, %p174
    %p176 = scmp.ne.s32.totalorder %s165, %s168
    %p177 = scmp.eq.s32.totalorder %s16, 1
    %p178 = por %p176, %p177
    %p179 = scmp.ne.s32.totalorder %s168, %s169
    %p180 = scmp.eq.s32.totalorder %s16, 0
    %p181 = por %p179, %p180
    %p182 = scmp.ne.s32.totalorder %s168, %s169
    %p183 = scmp.eq.s32.totalorder %s17, 1
    %p184 = por %p182, %p183
    %p186 = scmp.ne.s32.totalorder %s169, %s185
    %p187 = scmp.eq.s32.totalorder %s17, 0
    %p188 = por %p186, %p187
    %p189 = scmp.le.s32.totalorder 1, %s11
    %p190 = scmp.lt.s32.totalorder %s11, 3
    %p191 = pnand %p189, %p190
    %p192 = pneg %p191
    // Predicated region
    $region9: #{basic_block_forward.3} parent=5 // pred_check
      _
    $region10: #{basic_block_forward.3} parent=5 // pred_check_branch
      %194 = sbr.rel (%p191) target = $region12
    $region11: #{basic_block_forward.3} parent=5 // pred_region
      %s195 = ssub.s32 %s11, 1
      // Predicated region
      $region13: #{basic_block_forward.3} parent=11 // pred_check
        %p196 = pneg %p75
      $region14: #{basic_block_forward.3} parent=11 // pred_check_branch
        %198 = sbr.rel (%p196) target = $region16
      $region15: #{basic_block_forward.3} parent=11 // pred_region
        %p199 = scmp.lt.s32.totalorder %s21, 0
        %s200 = scalar_select %p199, %s21, 0
        %s201 = smul.addr %s200, 4
        %s202 = scalar_lea.vmem %s1, %s201
      $region16: #{basic_block_forward.3} parent=11 // pred_fallthru
        _
      // Predicated region
      $region17: #{basic_block_forward.3} parent=11 // pred_check
        %p203 = pneg %p101
      $region18: #{basic_block_forward.3} parent=11 // pred_check_branch
        %205 = sbr.rel (%p203) target = $region20
      $region19: #{basic_block_forward.3} parent=11 // pred_region
        %p206 = scmp.lt.s32.totalorder %s21, 0
        %s207 = scalar_select %p206, %s21, 0
        %s208 = scalar_lea.vmem %s2, %s207
      $region20: #{basic_block_forward.3} parent=11 // pred_fallthru
        _
      // Predicated region
      $region21: #{basic_block_forward.3} parent=11 // pred_check
        %p209 = pneg %p153
      $region22: #{basic_block_forward.3} parent=11 // pred_check_branch
        %211 = sbr.rel (%p209) target = $region24
      $region23: #{basic_block_forward.3} parent=11 // pred_region
        %p212 = scmp.lt.s32.totalorder %s21, 0
        %s213 = scalar_select %p212, %s21, 0
        %s214 = smul.addr %s213, 2
        %s215 = scalar_lea.vmem %s4, %s214
      $region24: #{basic_block_forward.3} parent=11 // pred_fallthru
        _
    $region12: #{basic_block_forward.3} parent=5 // pred_fallthru
      _
    %p216 = scmp.lt.s32.totalorder %s11, 2
    // Predicated region
    $region25: #{basic_block_forward.3} parent=5 // pred_check
      %p217 = pneg %p216
    $region26: #{basic_block_forward.3} parent=5 // pred_check_branch
      %219 = sbr.rel (%p217) target = $region28
    $region27: #{basic_block_forward.3} parent=5 // pred_region
      // Predicated region
      $region29: #{basic_block_forward.3} parent=27 // pred_check
        %p220 = pneg %p43
      $region30: #{basic_block_forward.3} parent=27 // pred_check_branch
        %222 = sbr.rel (%p220) target = $region32
      $region31: #{basic_block_forward.3} parent=27 // pred_region
        %p223 = scmp.lt.s32.totalorder %s18, 1
        %s224 = scalar_select %p223, %s18, 1
        %s225 = smul.addr %s224, 20
        %s226 = smul.addr %s225, 4
        %s227 = scalar_lea.vmem %s0, %s226
      $region32: #{basic_block_forward.3} parent=27 // pred_fallthru
        _
      // Predicated region
      $region33: #{basic_block_forward.3} parent=27 // pred_check
        %p228 = pneg %p121
      $region34: #{basic_block_forward.3} parent=27 // pred_check_branch
        %230 = sbr.rel (%p228) target = $region36
      $region35: #{basic_block_forward.3} parent=27 // pred_region
        %p231 = scmp.lt.s32.totalorder %s18, 1
        %s232 = scalar_select %p231, %s18, 1
        %s233 = smul.addr %s232, 8
        %s234 = smul.addr %s233, 4
        %s235 = scalar_lea.vmem %s3, %s234
      $region36: #{basic_block_forward.3} parent=27 // pred_fallthru
        _
    $region28: #{basic_block_forward.3} parent=5 // pred_fallthru
      _
    %p236 = scmp.le.s32.totalorder 1, %s11
    %p237 = scmp.lt.s32.totalorder %s11, 3
    %p238 = pnand %p236, %p237
    %p239 = pneg %p238
    // Predicated region
    $region37: #{basic_block_forward.3} parent=5 // pred_check
      _
    $region38: #{basic_block_forward.3} parent=5 // pred_check_branch
      %241 = sbr.rel (%p238) target = $region40
    $region39: #{basic_block_forward.3} parent=5 // pred_region
      %s242 = ssub.s32 %s11, 1
      %p243 = scmp.lt.s32.totalorder %s20, 1
      %s244 = scalar_select %p243, %s20, 1
      %s245 = smul.addr %s244, 20
      %s246 = smul.addr %s245, 4
      %s247 = scalar_lea.vmem %s0, %s246
      %p248 = pneg %p49
      %p249 = pneg %p46
      %p250 = scmp.lt.s32.totalorder %s21, 0
      %s251 = scalar_select %p250, %s21, 0
      %s252 = smul.addr %s251, 4
      %s253 = scalar_lea.vmem %s1, %s252
      %p254 = pneg %p75
      %p255 = pneg %p72
      %p256 = scmp.lt.s32.totalorder %s21, 0
      %s257 = scalar_select %p256, %s21, 0
      %s258 = scalar_lea.vmem %s2, %s257
      %p259 = pneg %p101
      %p260 = pneg %p98
      %p261 = scmp.lt.s32.totalorder %s20, 1
      %s262 = scalar_select %p261, %s20, 1
      %s263 = smul.addr %s262, 8
      %s264 = smul.addr %s263, 4
      %s265 = scalar_lea.vmem %s3, %s264
      %p266 = pneg %p127
      %p267 = pneg %p124
      %p268 = scmp.lt.s32.totalorder %s21, 0
      %s269 = scalar_select %p268, %s21, 0
      %s270 = smul.addr %s269, 2
      %s271 = scalar_lea.vmem %s4, %s270
      %p272 = pneg %p153
      %p273 = pneg %p150
      %p274 = pneg %p181
      %p275 = pneg %p178
      %p276 = scmp.lt.s32.totalorder %s20, 1
      %s277 = scalar_select %p276, %s20, 1
      %p278 = scmp.lt.s32.totalorder %s21, 0
      %s279 = scalar_select %p278, %s21, 0
      %s280 = smul.addr %s277, 8
      %s281 = sadd.s32 %s279, %s280
      %s282 = smul.addr %s281, 8
      %s283 = scalar_lea.vmem %s5, %s282
      %p284 = scmp.lt.s32.totalorder %s20, 1
      %s285 = scalar_select %p284, %s20, 1
      %s286 = smul.addr %s285, 20
      %s287 = smul.addr %s286, 4
      %s288 = scalar_lea.vmem %s0, %s287
      %p289 = scmp.lt.s32.totalorder %s21, 0
      %s290 = scalar_select %p289, %s21, 0
      %s291 = smul.addr %s290, 4
      %s292 = scalar_lea.vmem %s1, %s291
      %p293 = scmp.lt.s32.totalorder %s21, 0
      %s294 = scalar_select %p293, %s21, 0
      %s295 = scalar_lea.vmem %s2, %s294
      %p296 = scmp.lt.s32.totalorder %s20, 1
      %s297 = scalar_select %p296, %s20, 1
      %s298 = smul.addr %s297, 8
      %s299 = smul.addr %s298, 4
      %s300 = scalar_lea.vmem %s3, %s299
      %p301 = scmp.lt.s32.totalorder %s21, 0
      %s302 = scalar_select %p301, %s21, 0
      %s303 = smul.addr %s302, 2
      %s304 = scalar_lea.vmem %s4, %s303
      %p305 = scmp.lt.s32.totalorder %s20, 1
      %s306 = scalar_select %p305, %s20, 1
      %p307 = scmp.lt.s32.totalorder %s21, 0
      %s308 = scalar_select %p307, %s21, 0
      %s309 = smul.addr %s306, 8
      %s310 = sadd.s32 %s308, %s309
      %s311 = smul.addr %s310, 8
      %s312 = scalar_lea.vmem %s5, %s311
      %v314 = vld [vmem:[%s300] sm:$0xf]
      %v315 = vld [vmem:[%s300 + $0x4] sm:$0xf]
      %v316 = vld [vmem:[%s300 + $0x8] sm:$0xf]
      %v317 = vld [vmem:[%s300 + $0xc] sm:$0xf]
      %v318 = vld [vmem:[%s300 + $0x10] sm:$0xf]
      %v319 = vld [vmem:[%s300 + $0x14] sm:$0xf]
      %v320 = vld [vmem:[%s300 + $0x18] sm:$0xf]
      %v321 = vld [vmem:[%s300 + $0x1c] sm:$0xf]
      %v322 = vld [vmem:[%s304] sm:$0x3]
      %v323 = vld [vmem:[%s288] sm:$0xf]
      %v324 = vld [vmem:[%s288 + $0x8] sm:$0xf]
      %v325 = vld [vmem:[%s288 + $0x10] sm:$0xf]
      %v326 = vld [vmem:[%s288 + $0x18] sm:$0xf]
      %v327 = vld [vmem:[%s288 + $0x20] sm:$0xf]
      %v328 = vld [vmem:[%s288 + $0x28] sm:$0xf]
      %v329 = vld [vmem:[%s288 + $0x30] sm:$0xf]
      %v330 = vld [vmem:[%s288 + $0x38] sm:$0xf]
      %v331 = vld [vmem:[%s292] sm:$0xf]
      %v340 = vunpack.c.l.b16 %v323
      %v341 = vunpack.c.l.b16 %v324
      %v342 = vunpack.c.l.b16 %v325
      %v343 = vunpack.c.l.b16 %v326
      %v344 = vunpack.c.l.b16 %v327
      %v345 = vunpack.c.l.b16 %v328
      %v346 = vunpack.c.l.b16 %v329
      %v347 = vunpack.c.l.b16 %v330
      %v348 = vpack.c.b16 %v341, %v340
      %v349 = vpack.c.b16 %v343, %v342
      %v350 = vpack.c.b16 %v345, %v344
      %v351 = vpack.c.b16 %v347, %v346
      %vm352 = vcmask 64512
      %v354 = vsel %vm352, %v348, 0
      %v357 = vsel %vm352, %v349, 0
      %v360 = vsel %vm352, %v350, 0
      %v363 = vsel %vm352, %v351, 0
      %vm365 = vcmask 1043456
      %v367 = vsel %vm365, %v331, 0
      %369 = vmatprep.subr.bf16.mxu0 0
      %370 = vmatpush1.bf16.msra.mxu0 %v367
      %371 = vmatprep.subr.bf16.mxu0 0
      %372 = vmatpush1.bf16.msra.mxu0 0
      %373 = vmatprep.subr.bf16.mxu0 0
      %374 = vmatpush1.bf16.msra.mxu0 0
      %375 = vmatprep.subr.bf16.mxu0 0
      %376 = vmatpush1.bf16.msra.mxu0 0
      %377 = vmatprep.subr.bf16.mxu0 0
      %378 = vmatpush1.bf16.msra.mxu0 0
      %379 = vmatprep.subr.bf16.mxu0 0
      %380 = vmatpush1.bf16.msra.mxu0 0
      %381 = vmatprep.subr.bf16.mxu0 0
      %382 = vmatpush1.bf16.msra.mxu0 0
      %383 = vmatprep.subr.bf16.mxu0 0
      %384 = vmatpush1.bf16.msra.mxu0 0
      %385 = vmatprep.subr.bf16.mxu0 0
      %386 = vmatpush1.bf16.msra.mxu0 0
      %387 = vmatprep.subr.bf16.mxu0 0
      %388 = vmatpush1.bf16.msra.mxu0 0
      %389 = vmatprep.subr.bf16.mxu0 0
      %390 = vmatpush1.bf16.msra.mxu0 0
      %391 = vmatprep.subr.bf16.mxu0 0
      %392 = vmatpush1.bf16.msra.mxu0 0
      %393 = vmatprep.subr.bf16.mxu0 0
      %394 = vmatpush1.bf16.msra.mxu0 0
      %395 = vmatprep.subr.bf16.mxu0 0
      %396 = vmatpush1.bf16.msra.mxu0 0
      %397 = vmatprep.subr.bf16.mxu0 0
      %398 = vmatpush1.bf16.msra.mxu0 0
      %399 = vmatprep.subr.bf16.mxu0 0
      %400 = vmatpush1.bf16.msra.mxu0 0
      %401 = vmatprep.mubr.bf16.mxu0 0
      %402 = vmatmul.mubr.bf16.gmra.mrb[0].mxu0 %v354
      %v403 = vpop.f32.mrb[0].mxu0
      %v404 = vadd.f32 0.0, %v403
      %v405 = vpop.f32.mrb[0].mxu0
      %v406 = vpop.f32.mrb[0].mxu0
      %v407 = vadd.f32 0.0, %v406
      %v408 = vpop.f32.mrb[0].mxu0
      %409 = vmatprep.mubr.bf16.mxu0 0
      %410 = vmatmul.mubr.bf16.gmra.mrb[0].mxu0 %v357
      %v411 = vpop.f32.mrb[0].mxu0
      %v412 = vadd.f32 0.0, %v411
      %v413 = vpop.f32.mrb[0].mxu0
      %v414 = vpop.f32.mrb[0].mxu0
      %v415 = vadd.f32 0.0, %v414
      %v416 = vpop.f32.mrb[0].mxu0
      %417 = vmatprep.mubr.bf16.mxu0 0
      %418 = vmatmul.mubr.bf16.gmra.mrb[0].mxu0 %v360
      %v419 = vpop.f32.mrb[0].mxu0
      %v420 = vadd.f32 0.0, %v419
      %v421 = vpop.f32.mrb[0].mxu0
      %v422 = vpop.f32.mrb[0].mxu0
      %v423 = vadd.f32 0.0, %v422
      %v424 = vpop.f32.mrb[0].mxu0
      %425 = vmatprep.mubr.bf16.mxu0 0
      %426 = vmatmul.mubr.bf16.gmra.mrb[0].mxu0 %v363
      %v427 = vpop.f32.mrb[0].mxu0
      %v428 = vadd.f32 0.0, %v427
      %v429 = vpop.f32.mrb[0].mxu0
      %v430 = vpop.f32.mrb[0].mxu0
      %v431 = vadd.f32 0.0, %v430
      %v432 = vpop.f32.mrb[0].mxu0
      %433 = vdwg.mxu0
      %v442 = vunpack.c.l.b16 %v314
      %v443 = vunpack.c.l.b16 %v315
      %v444 = vunpack.c.l.b16 %v316
      %v445 = vunpack.c.l.b16 %v317
      %v446 = vunpack.c.l.b16 %v318
      %v447 = vunpack.c.l.b16 %v319
      %v448 = vunpack.c.l.b16 %v320
      %v449 = vunpack.c.l.b16 %v321
      %v450 = vpack.c.b16 %v443, %v442
      %v451 = vpack.c.b16 %v445, %v444
      %v452 = vpack.c.b16 %v447, %v446
      %v453 = vpack.c.b16 %v449, %v448
      %vm454 = vcmask 31744
      %v456 = vsel %vm454, %v450, 0
      %v459 = vsel %vm454, %v451, 0
      %v462 = vsel %vm454, %v452, 0
      %v465 = vsel %vm454, %v453, 0
      %vm467 = vcmask 1041408
      %v469 = vsel %vm467, %v322, 0
      %471 = vmatprep.subr.bf16.mxu0 0
      %472 = vmatpush1.bf16.msra.mxu0 %v469
      %473 = vmatprep.subr.bf16.mxu0 0
      %474 = vmatpush1.bf16.msra.mxu0 0
      %475 = vmatprep.subr.bf16.mxu0 0
      %476 = vmatpush1.bf16.msra.mxu0 0
      %477 = vmatprep.subr.bf16.mxu0 0
      %478 = vmatpush1.bf16.msra.mxu0 0
      %479 = vmatprep.subr.bf16.mxu0 0
      %480 = vmatpush1.bf16.msra.mxu0 0
      %481 = vmatprep.subr.bf16.mxu0 0
      %482 = vmatpush1.bf16.msra.mxu0 0
      %483 = vmatprep.subr.bf16.mxu0 0
      %484 = vmatpush1.bf16.msra.mxu0 0
      %485 = vmatprep.subr.bf16.mxu0 0
      %486 = vmatpush1.bf16.msra.mxu0 0
      %487 = vmatprep.subr.bf16.mxu0 0
      %488 = vmatpush1.bf16.msra.mxu0 0
      %489 = vmatprep.subr.bf16.mxu0 0
      %490 = vmatpush1.bf16.msra.mxu0 0
      %491 = vmatprep.subr.bf16.mxu0 0
      %492 = vmatpush1.bf16.msra.mxu0 0
      %493 = vmatprep.subr.bf16.mxu0 0
      %494 = vmatpush1.bf16.msra.mxu0 0
      %495 = vmatprep.subr.bf16.mxu0 0
      %496 = vmatpush1.bf16.msra.mxu0 0
      %497 = vmatprep.subr.bf16.mxu0 0
      %498 = vmatpush1.bf16.msra.mxu0 0
      %499 = vmatprep.subr.bf16.mxu0 0
      %500 = vmatpush1.bf16.msra.mxu0 0
      %501 = vmatprep.subr.bf16.mxu0 0
      %502 = vmatpush1.bf16.msra.mxu0 0
      %503 = vmatprep.mubr.bf16.mxu0 0
      %504 = vmatmul.mubr.bf16.gmra.mrb[0].mxu0 %v456
      %v505 = vpop.f32.mrb[0].mxu0
      %v506 = vadd.f32 %v404, %v505
      %v507 = vpop.f32.mrb[0].mxu0
      %v508 = vpop.f32.mrb[0].mxu0
      %v509 = vadd.f32 %v407, %v508
      %v510 = vpop.f32.mrb[0].mxu0
      %511 = vmatprep.mubr.bf16.mxu0 0
      %512 = vmatmul.mubr.bf16.gmra.mrb[0].mxu0 %v459
      %v513 = vpop.f32.mrb[0].mxu0
      %v514 = vadd.f32 %v412, %v513
      %v515 = vpop.f32.mrb[0].mxu0
      %v516 = vpop.f32.mrb[0].mxu0
      %v517 = vadd.f32 %v415, %v516
      %v518 = vpop.f32.mrb[0].mxu0
      %519 = vmatprep.mubr.bf16.mxu0 0
      %520 = vmatmul.mubr.bf16.gmra.mrb[0].mxu0 %v462
      %v521 = vpop.f32.mrb[0].mxu0
      %v522 = vadd.f32 %v420, %v521
      %v523 = vpop.f32.mrb[0].mxu0
      %v524 = vpop.f32.mrb[0].mxu0
      %v525 = vadd.f32 %v423, %v524
      %v526 = vpop.f32.mrb[0].mxu0
      %527 = vmatprep.mubr.bf16.mxu0 0
      %528 = vmatmul.mubr.bf16.gmra.mrb[0].mxu0 %v465
      %v529 = vpop.f32.mrb[0].mxu0
      %v530 = vadd.f32 %v428, %v529
      %v531 = vpop.f32.mrb[0].mxu0
      %v532 = vpop.f32.mrb[0].mxu0
      %v533 = vadd.f32 %v431, %v532
      %v534 = vpop.f32.mrb[0].mxu0
      %535 = vdwg.mxu0
      %v536 = vld [vmem:[%s288] sm:$0xf]
      %v537 = vld [vmem:[%s288 + $0x4] sm:$0x1]
      %v538 = vld [vmem:[%s288 + $0x8] sm:$0xf]
      %v539 = vld [vmem:[%s288 + $0xc] sm:$0x1]
      %v540 = vld [vmem:[%s288 + $0x10] sm:$0xf]
      %v541 = vld [vmem:[%s288 + $0x14] sm:$0x1]
      %v542 = vld [vmem:[%s288 + $0x18] sm:$0xf]
      %v543 = vld [vmem:[%s288 + $0x1c] sm:$0x1]
      %v544 = vld [vmem:[%s288 + $0x20] sm:$0xf]
      %v545 = vld [vmem:[%s288 + $0x24] sm:$0x1]
      %v546 = vld [vmem:[%s288 + $0x28] sm:$0xf]
      %v547 = vld [vmem:[%s288 + $0x2c] sm:$0x1]
      %v548 = vld [vmem:[%s288 + $0x30] sm:$0xf]
      %v549 = vld [vmem:[%s288 + $0x34] sm:$0x1]
      %v550 = vld [vmem:[%s288 + $0x38] sm:$0xf]
      %v551 = vld [vmem:[%s288 + $0x3c] sm:$0x1]
      %vm552 = vsmask.f32 3328
      %vm553 = vsmask.f32 7440
      %vm554 = vmor %vm552, %vm553
      %v556 = vshrl.u32 %v536, 16
      %v558 = vrot.slane %v556, 4
      %v559 = vshll.u32 %v536, 16
      %v561 = vrot.slane %v559, 5
      %v562 = vor.u32 %v558, %v561
      %v563 = vrot.slane %v562, 4
      %v565 = vshll.u32 %v537, 16
      %v567 = vrot.slane %v565, 5
      %v568 = vsel %vm554, %v563, %v567
      %v570 = vshrl.u32 %v538, 16
      %v572 = vrot.slane %v570, 4
      %v573 = vshll.u32 %v538, 16
      %v575 = vrot.slane %v573, 5
      %v576 = vor.u32 %v572, %v575
      %v577 = vrot.slane %v576, 4
      %v579 = vshll.u32 %v539, 16
      %v581 = vrot.slane %v579, 5
      %v582 = vsel %vm554, %v577, %v581
      %v584 = vshrl.u32 %v540, 16
      %v586 = vrot.slane %v584, 4
      %v587 = vshll.u32 %v540, 16
      %v589 = vrot.slane %v587, 5
      %v590 = vor.u32 %v586, %v589
      %v591 = vrot.slane %v590, 4
      %v593 = vshll.u32 %v541, 16
      %v595 = vrot.slane %v593, 5
      %v596 = vsel %vm554, %v591, %v595
      %v598 = vshrl.u32 %v542, 16
      %v600 = vrot.slane %v598, 4
      %v601 = vshll.u32 %v542, 16
      %v603 = vrot.slane %v601, 5
      %v604 = vor.u32 %v600, %v603
      %v605 = vrot.slane %v604, 4
      %v607 = vshll.u32 %v543, 16
      %v609 = vrot.slane %v607, 5
      %v610 = vsel %vm554, %v605, %v609
      %v612 = vshrl.u32 %v544, 16
      %v614 = vrot.slane %v612, 4
      %v615 = vshll.u32 %v544, 16
      %v617 = vrot.slane %v615, 5
      %v618 = vor.u32 %v614, %v617
      %v619 = vrot.slane %v618, 4
      %v621 = vshll.u32 %v545, 16
      %v623 = vrot.slane %v621, 5
      %v624 = vsel %vm554, %v619, %v623
      %v626 = vshrl.u32 %v546, 16
      %v628 = vrot.slane %v626, 4
      %v629 = vshll.u32 %v546, 16
      %v631 = vrot.slane %v629, 5
      %v632 = vor.u32 %v628, %v631
      %v633 = vrot.slane %v632, 4
      %v635 = vshll.u32 %v547, 16
      %v637 = vrot.slane %v635, 5
      %v638 = vsel %vm554, %v633, %v637
      %v640 = vshrl.u32 %v548, 16
      %v642 = vrot.slane %v640, 4
      %v643 = vshll.u32 %v548, 16
      %v645 = vrot.slane %v643, 5
      %v646 = vor.u32 %v642, %v645
      %v647 = vrot.slane %v646, 4
      %v649 = vshll.u32 %v549, 16
      %v651 = vrot.slane %v649, 5
      %v652 = vsel %vm554, %v647, %v651
      %v654 = vshrl.u32 %v550, 16
      %v656 = vrot.slane %v654, 4
      %v657 = vshll.u32 %v550, 16
      %v659 = vrot.slane %v657, 5
      %v660 = vor.u32 %v656, %v659
      %v661 = vrot.slane %v660, 4
      %v663 = vshll.u32 %v551, 16
      %v665 = vrot.slane %v663, 5
      %v666 = vsel %vm554, %v661, %v665
      %s667 = scalar_lea.vmem %s292, 4
      %v668 = vld [vmem:[%s667] sm:$0xf]
      %v669 = vunpack.c.l.b16 %v568
      %v670 = vunpack.c.l.b16 %v582
      %v671 = vunpack.c.l.b16 %v596
      %v672 = vunpack.c.l.b16 %v610
      %v673 = vunpack.c.l.b16 %v624
      %v674 = vunpack.c.l.b16 %v638
      %v675 = vunpack.c.l.b16 %v652
      %v676 = vunpack.c.l.b16 %v666
      %v677 = vpack.c.b16 %v670, %v669
      %v678 = vpack.c.b16 %v672, %v671
      %v679 = vpack.c.b16 %v674, %v673
      %v680 = vpack.c.b16 %v676, %v675
      %v682 = vsel %vm352, %v677, 0
      %v685 = vsel %vm352, %v678, 0
      %v688 = vsel %vm352, %v679, 0
      %v691 = vsel %vm352, %v680, 0
      %v694 = vsel %vm365, %v668, 0
      %696 = vmatprep.subr.bf16.mxu0 0
      %697 = vmatpush1.bf16.msra.mxu0 %v694
      %698 = vmatprep.subr.bf16.mxu0 0
      %699 = vmatpush1.bf16.msra.mxu0 0
      %700 = vmatprep.subr.bf16.mxu0 0
      %701 = vmatpush1.bf16.msra.mxu0 0
      %702 = vmatprep.subr.bf16.mxu0 0
      %703 = vmatpush1.bf16.msra.mxu0 0
      %704 = vmatprep.subr.bf16.mxu0 0
      %705 = vmatpush1.bf16.msra.mxu0 0
      %706 = vmatprep.subr.bf16.mxu0 0
      %707 = vmatpush1.bf16.msra.mxu0 0
      %708 = vmatprep.subr.bf16.mxu0 0
      %709 = vmatpush1.bf16.msra.mxu0 0
      %710 = vmatprep.subr.bf16.mxu0 0
      %711 = vmatpush1.bf16.msra.mxu0 0
      %712 = vmatprep.subr.bf16.mxu0 0
      %713 = vmatpush1.bf16.msra.mxu0 0
      %714 = vmatprep.subr.bf16.mxu0 0
      %715 = vmatpush1.bf16.msra.mxu0 0
      %716 = vmatprep.subr.bf16.mxu0 0
      %717 = vmatpush1.bf16.msra.mxu0 0
      %718 = vmatprep.subr.bf16.mxu0 0
      %719 = vmatpush1.bf16.msra.mxu0 0
      %720 = vmatprep.subr.bf16.mxu0 0
      %721 = vmatpush1.bf16.msra.mxu0 0
      %722 = vmatprep.subr.bf16.mxu0 0
      %723 = vmatpush1.bf16.msra.mxu0 0
      %724 = vmatprep.subr.bf16.mxu0 0
      %725 = vmatpush1.bf16.msra.mxu0 0
      %726 = vmatprep.subr.bf16.mxu0 0
      %727 = vmatpush1.bf16.msra.mxu0 0
      %728 = vmatprep.mubr.bf16.mxu0 0
      %729 = vmatmul.mubr.bf16.gmra.mrb[0].mxu0 %v682
      %v730 = vpop.f32.mrb[0].mxu0
      %v731 = vadd.f32 0.0, %v730
      %v732 = vpop.f32.mrb[0].mxu0
      %v733 = vpop.f32.mrb[0].mxu0
      %v734 = vadd.f32 0.0, %v733
      %v735 = vpop.f32.mrb[0].mxu0
      %736 = vmatprep.mubr.bf16.mxu0 0
      %737 = vmatmul.mubr.bf16.gmra.mrb[0].mxu0 %v685
      %v738 = vpop.f32.mrb[0].mxu0
      %v739 = vadd.f32 0.0, %v738
      %v740 = vpop.f32.mrb[0].mxu0
      %v741 = vpop.f32.mrb[0].mxu0
      %v742 = vadd.f32 0.0, %v741
      %v743 = vpop.f32.mrb[0].mxu0
      %744 = vmatprep.mubr.bf16.mxu0 0
      %745 = vmatmul.mubr.bf16.gmra.mrb[0].mxu0 %v688
      %v746 = vpop.f32.mrb[0].mxu0
      %v747 = vadd.f32 0.0, %v746
      %v748 = vpop.f32.mrb[0].mxu0
      %v749 = vpop.f32.mrb[0].mxu0
      %v750 = vadd.f32 0.0, %v749
      %v751 = vpop.f32.mrb[0].mxu0
      %752 = vmatprep.mubr.bf16.mxu0 0
      %753 = vmatmul.mubr.bf16.gmra.mrb[0].mxu0 %v691
      %v754 = vpop.f32.mrb[0].mxu0
      %v755 = vadd.f32 0.0, %v754
      %v756 = vpop.f32.mrb[0].mxu0
      %v757 = vpop.f32.mrb[0].mxu0
      %v758 = vadd.f32 0.0, %v757
      %v759 = vpop.f32.mrb[0].mxu0
      %760 = vdwg.mxu0
      %v761 = vadd.f32 %v506, %v731
      %v762 = vadd.f32 %v509, %v734
      %v763 = vadd.f32 %v514, %v739
      %v764 = vadd.f32 %v517, %v742
      %v765 = vadd.f32 %v522, %v747
      %v766 = vadd.f32 %v525, %v750
      %v767 = vadd.f32 %v530, %v755
      %v768 = vadd.f32 %v533, %v758
      %v769 = vld [vmem:[%s288] sm:$0xe]
      %v770 = vld [vmem:[%s288 + $0x8] sm:$0xe]
      %v771 = vld [vmem:[%s288 + $0x10] sm:$0xe]
      %v772 = vld [vmem:[%s288 + $0x18] sm:$0xe]
      %v773 = vld [vmem:[%s288 + $0x20] sm:$0xe]
      %v774 = vld [vmem:[%s288 + $0x28] sm:$0xe]
      %v775 = vld [vmem:[%s288 + $0x30] sm:$0xe]
      %v776 = vld [vmem:[%s288 + $0x38] sm:$0xe]
      %vm793 = vcmask 1042432
      %vm794 = vcmask 1046532
      %vm795 = vmor %vm793, %vm794
      %v796 = vrot.slane %v769, 5
      %v797 = vrot.slane %v796, 4
      %v798 = vrot.slane %v537, 5
      %v799 = vsel %vm795, %v797, %v798
      %v800 = vrot.slane %v770, 5
      %v801 = vrot.slane %v800, 4
      %v802 = vrot.slane %v539, 5
      %v803 = vsel %vm795, %v801, %v802
      %v804 = vrot.slane %v771, 5
      %v805 = vrot.slane %v804, 4
      %v806 = vrot.slane %v541, 5
      %v807 = vsel %vm795, %v805, %v806
      %v808 = vrot.slane %v772, 5
      %v809 = vrot.slane %v808, 4
      %v810 = vrot.slane %v543, 5
      %v811 = vsel %vm795, %v809, %v810
      %v812 = vrot.slane %v773, 5
      %v813 = vrot.slane %v812, 4
      %v814 = vrot.slane %v545, 5
      %v815 = vsel %vm795, %v813, %v814
      %v816 = vrot.slane %v774, 5
      %v817 = vrot.slane %v816, 4
      %v818 = vrot.slane %v547, 5
      %v819 = vsel %vm795, %v817, %v818
      %v820 = vrot.slane %v775, 5
      %v821 = vrot.slane %v820, 4
      %v822 = vrot.slane %v549, 5
      %v823 = vsel %vm795, %v821, %v822
      %v824 = vrot.slane %v776, 5
      %v825 = vrot.slane %v824, 4
      %v826 = vrot.slane %v551, 5
      %v827 = vsel %vm795, %v825, %v826
      %s828 = scalar_lea.vmem %s292, 8
      %v829 = vld [vmem:[%s828] sm:$0xf]
      %v830 = vunpack.c.l.b16 %v799
      %v831 = vunpack.c.l.b16 %v803
      %v832 = vunpack.c.l.b16 %v807
      %v833 = vunpack.c.l.b16 %v811
      %v834 = vunpack.c.l.b16 %v815
      %v835 = vunpack.c.l.b16 %v819
      %v836 = vunpack.c.l.b16 %v823
      %v837 = vunpack.c.l.b16 %v827
      %v838 = vpack.c.b16 %v831, %v830
      %v839 = vpack.c.b16 %v833, %v832
      %v840 = vpack.c.b16 %v835, %v834
      %v841 = vpack.c.b16 %v837, %v836
      %v843 = vsel %vm352, %v838, 0
      %v846 = vsel %vm352, %v839, 0
      %v849 = vsel %vm352, %v840, 0
      %v852 = vsel %vm352, %v841, 0
      %v855 = vsel %vm365, %v829, 0
      %857 = vmatprep.subr.bf16.mxu0 0
      %858 = vmatpush1.bf16.msra.mxu0 %v855
      %859 = vmatprep.subr.bf16.mxu0 0
      %860 = vmatpush1.bf16.msra.mxu0 0
      %861 = vmatprep.subr.bf16.mxu0 0
      %862 = vmatpush1.bf16.msra.mxu0 0
      %863 = vmatprep.subr.bf16.mxu0 0
      %864 = vmatpush1.bf16.msra.mxu0 0
      %865 = vmatprep.subr.bf16.mxu0 0
      %866 = vmatpush1.bf16.msra.mxu0 0
      %867 = vmatprep.subr.bf16.mxu0 0
      %868 = vmatpush1.bf16.msra.mxu0 0
      %869 = vmatprep.subr.bf16.mxu0 0
      %870 = vmatpush1.bf16.msra.mxu0 0
      %871 = vmatprep.subr.bf16.mxu0 0
      %872 = vmatpush1.bf16.msra.mxu0 0
      %873 = vmatprep.subr.bf16.mxu0 0
      %874 = vmatpush1.bf16.msra.mxu0 0
      %875 = vmatprep.subr.bf16.mxu0 0
      %876 = vmatpush1.bf16.msra.mxu0 0
      %877 = vmatprep.subr.bf16.mxu0 0
      %878 = vmatpush1.bf16.msra.mxu0 0
      %879 = vmatprep.subr.bf16.mxu0 0
      %880 = vmatpush1.bf16.msra.mxu0 0
      %881 = vmatprep.subr.bf16.mxu0 0
      %882 = vmatpush1.bf16.msra.mxu0 0
      %883 = vmatprep.subr.bf16.mxu0 0
      %884 = vmatpush1.bf16.msra.mxu0 0
      %885 = vmatprep.subr.bf16.mxu0 0
      %886 = vmatpush1.bf16.msra.mxu0 0
      %887 = vmatprep.subr.bf16.mxu0 0
      %888 = vmatpush1.bf16.msra.mxu0 0
      %889 = vmatprep.mubr.bf16.mxu0 0
      %890 = vmatmul.mubr.bf16.gmra.mrb[0].mxu0 %v843
      %v891 = vpop.f32.mrb[0].mxu0
      %v892 = vadd.f32 0.0, %v891
      %v893 = vpop.f32.mrb[0].mxu0
      %v894 = vpop.f32.mrb[0].mxu0
      %v895 = vadd.f32 0.0, %v894
      %v896 = vpop.f32.mrb[0].mxu0
      %897 = vmatprep.mubr.bf16.mxu0 0
      %898 = vmatmul.mubr.bf16.gmra.mrb[0].mxu0 %v846
      %v899 = vpop.f32.mrb[0].mxu0
      %v900 = vadd.f32 0.0, %v899
      %v901 = vpop.f32.mrb[0].mxu0
      %v902 = vpop.f32.mrb[0].mxu0
      %v903 = vadd.f32 0.0, %v902
      %v904 = vpop.f32.mrb[0].mxu0
      %905 = vmatprep.mubr.bf16.mxu0 0
      %906 = vmatmul.mubr.bf16.gmra.mrb[0].mxu0 %v849
      %v907 = vpop.f32.mrb[0].mxu0
      %v908 = vadd.f32 0.0, %v907
      %v909 = vpop.f32.mrb[0].mxu0
      %v910 = vpop.f32.mrb[0].mxu0
      %v911 = vadd.f32 0.0, %v910
      %v912 = vpop.f32.mrb[0].mxu0
      %913 = vmatprep.mubr.bf16.mxu0 0
      %914 = vmatmul.mubr.bf16.gmra.mrb[0].mxu0 %v852
      %v915 = vpop.f32.mrb[0].mxu0
      %v916 = vadd.f32 0.0, %v915
      %v917 = vpop.f32.mrb[0].mxu0
      %v918 = vpop.f32.mrb[0].mxu0
      %v919 = vadd.f32 0.0, %v918
      %v920 = vpop.f32.mrb[0].mxu0
      %921 = vdwg.mxu0
      %v922 = vadd.f32 %v761, %v892
      %v923 = vadd.f32 %v762, %v895
      %v924 = vadd.f32 %v763, %v900
      %v925 = vadd.f32 %v764, %v903
      %v926 = vadd.f32 %v765, %v908
      %v927 = vadd.f32 %v766, %v911
      %v928 = vadd.f32 %v767, %v916
      %v929 = vadd.f32 %v768, %v919
      %s930 = scalar_lea.vmem %s288, 8
      %v931 = vld [vmem:[%s930] sm:$0xf]
      %v932 = vld [vmem:[%s930 + $0x8] sm:$0xf]
      %v933 = vld [vmem:[%s930 + $0x10] sm:$0xf]
      %v934 = vld [vmem:[%s930 + $0x18] sm:$0xf]
      %v935 = vld [vmem:[%s930 + $0x20] sm:$0xf]
      %v936 = vld [vmem:[%s930 + $0x28] sm:$0xf]
      %v937 = vld [vmem:[%s930 + $0x30] sm:$0xf]
      %v938 = vld [vmem:[%s930 + $0x38] sm:$0xf]
      %s939 = scalar_lea.vmem %s292, 12
      %v940 = vld [vmem:[%s939] sm:$0xf]
      %v949 = vunpack.c.l.b16 %v931
      %v950 = vunpack.c.l.b16 %v932
      %v951 = vunpack.c.l.b16 %v933
      %v952 = vunpack.c.l.b16 %v934
      %v953 = vunpack.c.l.b16 %v935
      %v954 = vunpack.c.l.b16 %v936
      %v955 = vunpack.c.l.b16 %v937
      %v956 = vunpack.c.l.b16 %v938
      %v957 = vpack.c.b16 %v950, %v949
      %v958 = vpack.c.b16 %v952, %v951
      %v959 = vpack.c.b16 %v954, %v953
      %v960 = vpack.c.b16 %v956, %v955
      %v962 = vsel %vm352, %v957, 0
      %v965 = vsel %vm352, %v958, 0
      %v968 = vsel %vm352, %v959, 0
      %v971 = vsel %vm352, %v960, 0
      %v974 = vsel %vm365, %v940, 0
      %976 = vmatprep.subr.bf16.mxu0 0
      %977 = vmatpush1.bf16.msra.mxu0 %v974
      %978 = vmatprep.subr.bf16.mxu0 0
      %979 = vmatpush1.bf16.msra.mxu0 0
      %980 = vmatprep.subr.bf16.mxu0 0
      %981 = vmatpush1.bf16.msra.mxu0 0
      %982 = vmatprep.subr.bf16.mxu0 0
      %983 = vmatpush1.bf16.msra.mxu0 0
      %984 = vmatprep.subr.bf16.mxu0 0
      %985 = vmatpush1.bf16.msra.mxu0 0
      %986 = vmatprep.subr.bf16.mxu0 0
      %987 = vmatpush1.bf16.msra.mxu0 0
      %988 = vmatprep.subr.bf16.mxu0 0
      %989 = vmatpush1.bf16.msra.mxu0 0
      %990 = vmatprep.subr.bf16.mxu0 0
      %991 = vmatpush1.bf16.msra.mxu0 0
      %992 = vmatprep.subr.bf16.mxu0 0
      %993 = vmatpush1.bf16.msra.mxu0 0
      %994 = vmatprep.subr.bf16.mxu0 0
      %995 = vmatpush1.bf16.msra.mxu0 0
      %996 = vmatprep.subr.bf16.mxu0 0
      %997 = vmatpush1.bf16.msra.mxu0 0
      %998 = vmatprep.subr.bf16.mxu0 0
      %999 = vmatpush1.bf16.msra.mxu0 0
      %1000 = vmatprep.subr.bf16.mxu0 0
      %1001 = vmatpush1.bf16.msra.mxu0 0
      %1002 = vmatprep.subr.bf16.mxu0 0
      %1003 = vmatpush1.bf16.msra.mxu0 0
      %1004 = vmatprep.subr.bf16.mxu0 0
      %1005 = vmatpush1.bf16.msra.mxu0 0
      %1006 = vmatprep.subr.bf16.mxu0 0
      %1007 = vmatpush1.bf16.msra.mxu0 0
      %1008 = vmatprep.mubr.bf16.mxu0 0
      %1009 = vmatmul.mubr.bf16.gmra.mrb[0].mxu0 %v962
      %v1010 = vpop.f32.mrb[0].mxu0
      %v1011 = vadd.f32 0.0, %v1010
      %v1012 = vpop.f32.mrb[0].mxu0
      %v1013 = vpop.f32.mrb[0].mxu0
      %v1014 = vadd.f32 0.0, %v1013
      %v1015 = vpop.f32.mrb[0].mxu0
      %1016 = vmatprep.mubr.bf16.mxu0 0
      %1017 = vmatmul.mubr.bf16.gmra.mrb[0].mxu0 %v965
      %v1018 = vpop.f32.mrb[0].mxu0
      %v1019 = vadd.f32 0.0, %v1018
      %v1020 = vpop.f32.mrb[0].mxu0
      %v1021 = vpop.f32.mrb[0].mxu0
      %v1022 = vadd.f32 0.0, %v1021
      %v1023 = vpop.f32.mrb[0].mxu0
      %1024 = vmatprep.mubr.bf16.mxu0 0
      %1025 = vmatmul.mubr.bf16.gmra.mrb[0].mxu0 %v968
      %v1026 = vpop.f32.mrb[0].mxu0
      %v1027 = vadd.f32 0.0, %v1026
      %v1028 = vpop.f32.mrb[0].mxu0
      %v1029 = vpop.f32.mrb[0].mxu0
      %v1030 = vadd.f32 0.0, %v1029
      %v1031 = vpop.f32.mrb[0].mxu0
      %1032 = vmatprep.mubr.bf16.mxu0 0
      %1033 = vmatmul.mubr.bf16.gmra.mrb[0].mxu0 %v971
      %v1034 = vpop.f32.mrb[0].mxu0
      %v1035 = vadd.f32 0.0, %v1034
      %v1036 = vpop.f32.mrb[0].mxu0
      %v1037 = vpop.f32.mrb[0].mxu0
      %v1038 = vadd.f32 0.0, %v1037
      %v1039 = vpop.f32.mrb[0].mxu0
      %1040 = vdwg.mxu0
      %v1041 = vadd.f32 %v922, %v1011
      %v1042 = vadd.f32 %v923, %v1014
      %v1043 = vadd.f32 %v924, %v1019
      %v1044 = vadd.f32 %v925, %v1022
      %v1045 = vadd.f32 %v926, %v1027
      %v1046 = vadd.f32 %v927, %v1030
      %v1047 = vadd.f32 %v928, %v1035
      %v1048 = vadd.f32 %v929, %v1038
      %v1049 = vld [vmem:[%s930] sm:$0xf]
      %v1050 = vld [vmem:[%s930 + $0x4] sm:$0x1]
      %v1051 = vld [vmem:[%s930 + $0x8] sm:$0xf]
      %v1052 = vld [vmem:[%s930 + $0xc] sm:$0x1]
      %v1053 = vld [vmem:[%s930 + $0x10] sm:$0xf]
      %v1054 = vld [vmem:[%s930 + $0x14] sm:$0x1]
      %v1055 = vld [vmem:[%s930 + $0x18] sm:$0xf]
      %v1056 = vld [vmem:[%s930 + $0x1c] sm:$0x1]
      %v1057 = vld [vmem:[%s930 + $0x20] sm:$0xf]
      %v1058 = vld [vmem:[%s930 + $0x24] sm:$0x1]
      %v1059 = vld [vmem:[%s930 + $0x28] sm:$0xf]
      %v1060 = vld [vmem:[%s930 + $0x2c] sm:$0x1]
      %v1061 = vld [vmem:[%s930 + $0x30] sm:$0xf]
      %v1062 = vld [vmem:[%s930 + $0x34] sm:$0x1]
      %v1063 = vld [vmem:[%s930 + $0x38] sm:$0xf]
      %v1064 = vld [vmem:[%s930 + $0x3c] sm:$0x1]
      %v1066 = vshrl.u32 %v1049, 16
      %v1068 = vrot.slane %v1066, 4
      %v1069 = vshll.u32 %v1049, 16
      %v1071 = vrot.slane %v1069, 5
      %v1072 = vor.u32 %v1068, %v1071
      %v1073 = vrot.slane %v1072, 4
      %v1075 = vshll.u32 %v1050, 16
      %v1077 = vrot.slane %v1075, 5
      %v1078 = vsel %vm554, %v1073, %v1077
      %v1080 = vshrl.u32 %v1051, 16
      %v1082 = vrot.slane %v1080, 4
      %v1083 = vshll.u32 %v1051, 16
      %v1085 = vrot.slane %v1083, 5
      %v1086 = vor.u32 %v1082, %v1085
      %v1087 = vrot.slane %v1086, 4
      %v1089 = vshll.u32 %v1052, 16
      %v1091 = vrot.slane %v1089, 5
      %v1092 = vsel %vm554, %v1087, %v1091
      %v1094 = vshrl.u32 %v1053, 16
      %v1096 = vrot.slane %v1094, 4
      %v1097 = vshll.u32 %v1053, 16
      %v1099 = vrot.slane %v1097, 5
      %v1100 = vor.u32 %v1096, %v1099
      %v1101 = vrot.slane %v1100, 4
      %v1103 = vshll.u32 %v1054, 16
      %v1105 = vrot.slane %v1103, 5
      %v1106 = vsel %vm554, %v1101, %v1105
      %v1108 = vshrl.u32 %v1055, 16
      %v1110 = vrot.slane %v1108, 4
      %v1111 = vshll.u32 %v1055, 16
      %v1113 = vrot.slane %v1111, 5
      %v1114 = vor.u32 %v1110, %v1113
      %v1115 = vrot.slane %v1114, 4
      %v1117 = vshll.u32 %v1056, 16
      %v1119 = vrot.slane %v1117, 5
      %v1120 = vsel %vm554, %v1115, %v1119
      %v1122 = vshrl.u32 %v1057, 16
      %v1124 = vrot.slane %v1122, 4
      %v1125 = vshll.u32 %v1057, 16
      %v1127 = vrot.slane %v1125, 5
      %v1128 = vor.u32 %v1124, %v1127
      %v1129 = vrot.slane %v1128, 4
      %v1131 = vshll.u32 %v1058, 16
      %v1133 = vrot.slane %v1131, 5
      %v1134 = vsel %vm554, %v1129, %v1133
      %v1136 = vshrl.u32 %v1059, 16
      %v1138 = vrot.slane %v1136, 4
      %v1139 = vshll.u32 %v1059, 16
      %v1141 = vrot.slane %v1139, 5
      %v1142 = vor.u32 %v1138, %v1141
      %v1143 = vrot.slane %v1142, 4
      %v1145 = vshll.u32 %v1060, 16
      %v1147 = vrot.slane %v1145, 5
      %v1148 = vsel %vm554, %v1143, %v1147
      %v1150 = vshrl.u32 %v1061, 16
      %v1152 = vrot.slane %v1150, 4
      %v1153 = vshll.u32 %v1061, 16
      %v1155 = vrot.slane %v1153, 5
      %v1156 = vor.u32 %v1152, %v1155
      %v1157 = vrot.slane %v1156, 4
      %v1159 = vshll.u32 %v1062, 16
      %v1161 = vrot.slane %v1159, 5
      %v1162 = vsel %vm554, %v1157, %v1161
      %v1164 = vshrl.u32 %v1063, 16
      %v1166 = vrot.slane %v1164, 4
      %v1167 = vshll.u32 %v1063, 16
      %v1169 = vrot.slane %v1167, 5
      %v1170 = vor.u32 %v1166, %v1169
      %v1171 = vrot.slane %v1170, 4
      %v1173 = vshll.u32 %v1064, 16
      %v1175 = vrot.slane %v1173, 5
      %v1176 = vsel %vm554, %v1171, %v1175
      %s1177 = scalar_lea.vmem %s292, 16
      %v1178 = vld [vmem:[%s1177] sm:$0xf]
      %v1179 = vunpack.c.l.b16 %v1078
      %v1180 = vunpack.c.l.b16 %v1092
      %v1181 = vunpack.c.l.b16 %v1106
      %v1182 = vunpack.c.l.b16 %v1120
      %v1183 = vunpack.c.l.b16 %v1134
      %v1184 = vunpack.c.l.b16 %v1148
      %v1185 = vunpack.c.l.b16 %v1162
      %v1186 = vunpack.c.l.b16 %v1176
      %v1187 = vpack.c.b16 %v1180, %v1179
      %v1188 = vpack.c.b16 %v1182, %v1181
      %v1189 = vpack.c.b16 %v1184, %v1183
      %v1190 = vpack.c.b16 %v1186, %v1185
      %v1192 = vsel %vm352, %v1187, 0
      %v1195 = vsel %vm352, %v1188, 0
      %v1198 = vsel %vm352, %v1189, 0
      %v1201 = vsel %vm352, %v1190, 0
      %v1204 = vsel %vm365, %v1178, 0
      %1206 = vmatprep.subr.bf16.mxu0 0
      %1207 = vmatpush1.bf16.msra.mxu0 %v1204
      %1208 = vmatprep.subr.bf16.mxu0 0
      %1209 = vmatpush1.bf16.msra.mxu0 0
      %1210 = vmatprep.subr.bf16.mxu0 0
      %1211 = vmatpush1.bf16.msra.mxu0 0
      %1212 = vmatprep.subr.bf16.mxu0 0
      %1213 = vmatpush1.bf16.msra.mxu0 0
      %1214 = vmatprep.subr.bf16.mxu0 0
      %1215 = vmatpush1.bf16.msra.mxu0 0
      %1216 = vmatprep.subr.bf16.mxu0 0
      %1217 = vmatpush1.bf16.msra.mxu0 0
      %1218 = vmatprep.subr.bf16.mxu0 0
      %1219 = vmatpush1.bf16.msra.mxu0 0
      %1220 = vmatprep.subr.bf16.mxu0 0
      %1221 = vmatpush1.bf16.msra.mxu0 0
      %1222 = vmatprep.subr.bf16.mxu0 0
      %1223 = vmatpush1.bf16.msra.mxu0 0
      %1224 = vmatprep.subr.bf16.mxu0 0
      %1225 = vmatpush1.bf16.msra.mxu0 0
      %1226 = vmatprep.subr.bf16.mxu0 0
      %1227 = vmatpush1.bf16.msra.mxu0 0
      %1228 = vmatprep.subr.bf16.mxu0 0
      %1229 = vmatpush1.bf16.msra.mxu0 0
      %1230 = vmatprep.subr.bf16.mxu0 0
      %1231 = vmatpush1.bf16.msra.mxu0 0
      %1232 = vmatprep.subr.bf16.mxu0 0
      %1233 = vmatpush1.bf16.msra.mxu0 0
      %1234 = vmatprep.subr.bf16.mxu0 0
      %1235 = vmatpush1.bf16.msra.mxu0 0
      %1236 = vmatprep.subr.bf16.mxu0 0
      %1237 = vmatpush1.bf16.msra.mxu0 0
      %1238 = vmatprep.mubr.bf16.mxu0 0
      %1239 = vmatmul.mubr.bf16.gmra.mrb[0].mxu0 %v1192
      %v1240 = vpop.f32.mrb[0].mxu0
      %v1241 = vadd.f32 0.0, %v1240
      %v1242 = vpop.f32.mrb[0].mxu0
      %v1243 = vpop.f32.mrb[0].mxu0
      %v1244 = vadd.f32 0.0, %v1243
      %v1245 = vpop.f32.mrb[0].mxu0
      %1246 = vmatprep.mubr.bf16.mxu0 0
      %1247 = vmatmul.mubr.bf16.gmra.mrb[0].mxu0 %v1195
      %v1248 = vpop.f32.mrb[0].mxu0
      %v1249 = vadd.f32 0.0, %v1248
      %v1250 = vpop.f32.mrb[0].mxu0
      %v1251 = vpop.f32.mrb[0].mxu0
      %v1252 = vadd.f32 0.0, %v1251
      %v1253 = vpop.f32.mrb[0].mxu0
      %1254 = vmatprep.mubr.bf16.mxu0 0
      %1255 = vmatmul.mubr.bf16.gmra.mrb[0].mxu0 %v1198
      %v1256 = vpop.f32.mrb[0].mxu0
      %v1257 = vadd.f32 0.0, %v1256
      %v1258 = vpop.f32.mrb[0].mxu0
      %v1259 = vpop.f32.mrb[0].mxu0
      %v1260 = vadd.f32 0.0, %v1259
      %v1261 = vpop.f32.mrb[0].mxu0
      %1262 = vmatprep.mubr.bf16.mxu0 0
      %1263 = vmatmul.mubr.bf16.gmra.mrb[0].mxu0 %v1201
      %v1264 = vpop.f32.mrb[0].mxu0
      %v1265 = vadd.f32 0.0, %v1264
      %v1266 = vpop.f32.mrb[0].mxu0
      %v1267 = vpop.f32.mrb[0].mxu0
      %v1268 = vadd.f32 0.0, %v1267
      %v1269 = vpop.f32.mrb[0].mxu0
      %1270 = vdwg.mxu0
      %v1271 = vadd.f32 %v1041, %v1241
      %v1272 = vadd.f32 %v1042, %v1244
      %v1273 = vadd.f32 %v1043, %v1249
      %v1274 = vadd.f32 %v1044, %v1252
      %v1275 = vadd.f32 %v1045, %v1257
      %v1276 = vadd.f32 %v1046, %v1260
      %v1277 = vadd.f32 %v1047, %v1265
      %v1278 = vadd.f32 %v1048, %v1268
      %v1279 = vld [vmem:[%s930] sm:$0xe]
      %v1280 = vld [vmem:[%s930 + $0x8] sm:$0xe]
      %v1281 = vld [vmem:[%s930 + $0x10] sm:$0xe]
      %v1282 = vld [vmem:[%s930 + $0x18] sm:$0xe]
      %v1283 = vld [vmem:[%s930 + $0x20] sm:$0xe]
      %v1284 = vld [vmem:[%s930 + $0x28] sm:$0xe]
      %v1285 = vld [vmem:[%s930 + $0x30] sm:$0xe]
      %v1286 = vld [vmem:[%s930 + $0x38] sm:$0xe]
      %v1303 = vrot.slane %v1279, 5
      %v1304 = vrot.slane %v1303, 4
      %v1305 = vrot.slane %v1050, 5
      %v1306 = vsel %vm795, %v1304, %v1305
      %v1307 = vrot.slane %v1280, 5
      %v1308 = vrot.slane %v1307, 4
      %v1309 = vrot.slane %v1052, 5
      %v1310 = vsel %vm795, %v1308, %v1309
      %v1311 = vrot.slane %v1281, 5
      %v1312 = vrot.slane %v1311, 4
      %v1313 = vrot.slane %v1054, 5
      %v1314 = vsel %vm795, %v1312, %v1313
      %v1315 = vrot.slane %v1282, 5
      %v1316 = vrot.slane %v1315, 4
      %v1317 = vrot.slane %v1056, 5
      %v1318 = vsel %vm795, %v1316, %v1317
      %v1319 = vrot.slane %v1283, 5
      %v1320 = vrot.slane %v1319, 4
      %v1321 = vrot.slane %v1058, 5
      %v1322 = vsel %vm795, %v1320, %v1321
      %v1323 = vrot.slane %v1284, 5
      %v1324 = vrot.slane %v1323, 4
      %v1325 = vrot.slane %v1060, 5
      %v1326 = vsel %vm795, %v1324, %v1325
      %v1327 = vrot.slane %v1285, 5
      %v1328 = vrot.slane %v1327, 4
      %v1329 = vrot.slane %v1062, 5
      %v1330 = vsel %vm795, %v1328, %v1329
      %v1331 = vrot.slane %v1286, 5
      %v1332 = vrot.slane %v1331, 4
      %v1333 = vrot.slane %v1064, 5
      %v1334 = vsel %vm795, %v1332, %v1333
      %s1335 = scalar_lea.vmem %s292, 20
      %v1336 = vld [vmem:[%s1335] sm:$0xf]
      %v1337 = vunpack.c.l.b16 %v1306
      %v1338 = vunpack.c.l.b16 %v1310
      %v1339 = vunpack.c.l.b16 %v1314
      %v1340 = vunpack.c.l.b16 %v1318
      %v1341 = vunpack.c.l.b16 %v1322
      %v1342 = vunpack.c.l.b16 %v1326
      %v1343 = vunpack.c.l.b16 %v1330
      %v1344 = vunpack.c.l.b16 %v1334
      %v1345 = vpack.c.b16 %v1338, %v1337
      %v1346 = vpack.c.b16 %v1340, %v1339
      %v1347 = vpack.c.b16 %v1342, %v1341
      %v1348 = vpack.c.b16 %v1344, %v1343
      %v1350 = vsel %vm352, %v1345, 0
      %v1353 = vsel %vm352, %v1346, 0
      %v1356 = vsel %vm352, %v1347, 0
      %v1359 = vsel %vm352, %v1348, 0
      %v1362 = vsel %vm365, %v1336, 0
      %1364 = vmatprep.subr.bf16.mxu0 0
      %1365 = vmatpush1.bf16.msra.mxu0 %v1362
      %1366 = vmatprep.subr.bf16.mxu0 0
      %1367 = vmatpush1.bf16.msra.mxu0 0
      %1368 = vmatprep.subr.bf16.mxu0 0
      %1369 = vmatpush1.bf16.msra.mxu0 0
      %1370 = vmatprep.subr.bf16.mxu0 0
      %1371 = vmatpush1.bf16.msra.mxu0 0
      %1372 = vmatprep.subr.bf16.mxu0 0
      %1373 = vmatpush1.bf16.msra.mxu0 0
      %1374 = vmatprep.subr.bf16.mxu0 0
      %1375 = vmatpush1.bf16.msra.mxu0 0
      %1376 = vmatprep.subr.bf16.mxu0 0
      %1377 = vmatpush1.bf16.msra.mxu0 0
      %1378 = vmatprep.subr.bf16.mxu0 0
      %1379 = vmatpush1.bf16.msra.mxu0 0
      %1380 = vmatprep.subr.bf16.mxu0 0
      %1381 = vmatpush1.bf16.msra.mxu0 0
      %1382 = vmatprep.subr.bf16.mxu0 0
      %1383 = vmatpush1.bf16.msra.mxu0 0
      %1384 = vmatprep.subr.bf16.mxu0 0
      %1385 = vmatpush1.bf16.msra.mxu0 0
      %1386 = vmatprep.subr.bf16.mxu0 0
      %1387 = vmatpush1.bf16.msra.mxu0 0
      %1388 = vmatprep.subr.bf16.mxu0 0
      %1389 = vmatpush1.bf16.msra.mxu0 0
      %1390 = vmatprep.subr.bf16.mxu0 0
      %1391 = vmatpush1.bf16.msra.mxu0 0
      %1392 = vmatprep.subr.bf16.mxu0 0
      %1393 = vmatpush1.bf16.msra.mxu0 0
      %1394 = vmatprep.subr.bf16.mxu0 0
      %1395 = vmatpush1.bf16.msra.mxu0 0
      %1396 = vmatprep.mubr.bf16.mxu0 0
      %1397 = vmatmul.mubr.bf16.gmra.mrb[0].mxu0 %v1350
      %v1398 = vpop.f32.mrb[0].mxu0
      %v1399 = vadd.f32 0.0, %v1398
      %v1400 = vpop.f32.mrb[0].mxu0
      %v1401 = vpop.f32.mrb[0].mxu0
      %v1402 = vadd.f32 0.0, %v1401
      %v1403 = vpop.f32.mrb[0].mxu0
      %1404 = vmatprep.mubr.bf16.mxu0 0
      %1405 = vmatmul.mubr.bf16.gmra.mrb[0].mxu0 %v1353
      %v1406 = vpop.f32.mrb[0].mxu0
      %v1407 = vadd.f32 0.0, %v1406
      %v1408 = vpop.f32.mrb[0].mxu0
      %v1409 = vpop.f32.mrb[0].mxu0
      %v1410 = vadd.f32 0.0, %v1409
      %v1411 = vpop.f32.mrb[0].mxu0
      %1412 = vmatprep.mubr.bf16.mxu0 0
      %1413 = vmatmul.mubr.bf16.gmra.mrb[0].mxu0 %v1356
      %v1414 = vpop.f32.mrb[0].mxu0
      %v1415 = vadd.f32 0.0, %v1414
      %v1416 = vpop.f32.mrb[0].mxu0
      %v1417 = vpop.f32.mrb[0].mxu0
      %v1418 = vadd.f32 0.0, %v1417
      %v1419 = vpop.f32.mrb[0].mxu0
      %1420 = vmatprep.mubr.bf16.mxu0 0
      %1421 = vmatmul.mubr.bf16.gmra.mrb[0].mxu0 %v1359
      %v1422 = vpop.f32.mrb[0].mxu0
      %v1423 = vadd.f32 0.0, %v1422
      %v1424 = vpop.f32.mrb[0].mxu0
      %v1425 = vpop.f32.mrb[0].mxu0
      %v1426 = vadd.f32 0.0, %v1425
      %v1427 = vpop.f32.mrb[0].mxu0
      %1428 = vdwg.mxu0
      %v1429 = vadd.f32 %v1271, %v1399
      %v1430 = vadd.f32 %v1272, %v1402
      %v1431 = vadd.f32 %v1273, %v1407
      %v1432 = vadd.f32 %v1274, %v1410
      %v1433 = vadd.f32 %v1275, %v1415
      %v1434 = vadd.f32 %v1276, %v1418
      %v1435 = vadd.f32 %v1277, %v1423
      %v1436 = vadd.f32 %v1278, %v1426
      %s1437 = scalar_lea.vmem %s288, 16
      %v1438 = vld [vmem:[%s1437] sm:$0xf]
      %v1439 = vld [vmem:[%s1437 + $0x8] sm:$0xf]
      %v1440 = vld [vmem:[%s1437 + $0x10] sm:$0xf]
      %v1441 = vld [vmem:[%s1437 + $0x18] sm:$0xf]
      %v1442 = vld [vmem:[%s1437 + $0x20] sm:$0xf]
      %v1443 = vld [vmem:[%s1437 + $0x28] sm:$0xf]
      %v1444 = vld [vmem:[%s1437 + $0x30] sm:$0xf]
      %v1445 = vld [vmem:[%s1437 + $0x38] sm:$0xf]
      %s1446 = scalar_lea.vmem %s292, 24
      %v1447 = vld [vmem:[%s1446] sm:$0xf]
      %v1456 = vunpack.c.l.b16 %v1438
      %v1457 = vunpack.c.l.b16 %v1439
      %v1458 = vunpack.c.l.b16 %v1440
      %v1459 = vunpack.c.l.b16 %v1441
      %v1460 = vunpack.c.l.b16 %v1442
      %v1461 = vunpack.c.l.b16 %v1443
      %v1462 = vunpack.c.l.b16 %v1444
      %v1463 = vunpack.c.l.b16 %v1445
      %v1464 = vpack.c.b16 %v1457, %v1456
      %v1465 = vpack.c.b16 %v1459, %v1458
      %v1466 = vpack.c.b16 %v1461, %v1460
      %v1467 = vpack.c.b16 %v1463, %v1462
      %v1469 = vsel %vm352, %v1464, 0
      %v1472 = vsel %vm352, %v1465, 0
      %v1475 = vsel %vm352, %v1466, 0
      %v1478 = vsel %vm352, %v1467, 0
      %v1481 = vsel %vm365, %v1447, 0
      %1483 = vmatprep.subr.bf16.mxu0 0
      %1484 = vmatpush1.bf16.msra.mxu0 %v1481
      %1485 = vmatprep.subr.bf16.mxu0 0
      %1486 = vmatpush1.bf16.msra.mxu0 0
      %1487 = vmatprep.subr.bf16.mxu0 0
      %1488 = vmatpush1.bf16.msra.mxu0 0
      %1489 = vmatprep.subr.bf16.mxu0 0
      %1490 = vmatpush1.bf16.msra.mxu0 0
      %1491 = vmatprep.subr.bf16.mxu0 0
      %1492 = vmatpush1.bf16.msra.mxu0 0
      %1493 = vmatprep.subr.bf16.mxu0 0
      %1494 = vmatpush1.bf16.msra.mxu0 0
      %1495 = vmatprep.subr.bf16.mxu0 0
      %1496 = vmatpush1.bf16.msra.mxu0 0
      %1497 = vmatprep.subr.bf16.mxu0 0
      %1498 = vmatpush1.bf16.msra.mxu0 0
      %1499 = vmatprep.subr.bf16.mxu0 0
      %1500 = vmatpush1.bf16.msra.mxu0 0
      %1501 = vmatprep.subr.bf16.mxu0 0
      %1502 = vmatpush1.bf16.msra.mxu0 0
      %1503 = vmatprep.subr.bf16.mxu0 0
      %1504 = vmatpush1.bf16.msra.mxu0 0
      %1505 = vmatprep.subr.bf16.mxu0 0
      %1506 = vmatpush1.bf16.msra.mxu0 0
      %1507 = vmatprep.subr.bf16.mxu0 0
      %1508 = vmatpush1.bf16.msra.mxu0 0
      %1509 = vmatprep.subr.bf16.mxu0 0
      %1510 = vmatpush1.bf16.msra.mxu0 0
      %1511 = vmatprep.subr.bf16.mxu0 0
      %1512 = vmatpush1.bf16.msra.mxu0 0
      %1513 = vmatprep.subr.bf16.mxu0 0
      %1514 = vmatpush1.bf16.msra.mxu0 0
      %1515 = vmatprep.mubr.bf16.mxu0 0
      %1516 = vmatmul.mubr.bf16.gmra.mrb[0].mxu0 %v1469
      %v1517 = vpop.f32.mrb[0].mxu0
      %v1518 = vadd.f32 0.0, %v1517
      %v1519 = vpop.f32.mrb[0].mxu0
      %v1520 = vpop.f32.mrb[0].mxu0
      %v1521 = vadd.f32 0.0, %v1520
      %v1522 = vpop.f32.mrb[0].mxu0
      %1523 = vmatprep.mubr.bf16.mxu0 0
      %1524 = vmatmul.mubr.bf16.gmra.mrb[0].mxu0 %v1472
      %v1525 = vpop.f32.mrb[0].mxu0
      %v1526 = vadd.f32 0.0, %v1525
      %v1527 = vpop.f32.mrb[0].mxu0
      %v1528 = vpop.f32.mrb[0].mxu0
      %v1529 = vadd.f32 0.0, %v1528
      %v1530 = vpop.f32.mrb[0].mxu0
      %1531 = vmatprep.mubr.bf16.mxu0 0
      %1532 = vmatmul.mubr.bf16.gmra.mrb[0].mxu0 %v1475
      %v1533 = vpop.f32.mrb[0].mxu0
      %v1534 = vadd.f32 0.0, %v1533
      %v1535 = vpop.f32.mrb[0].mxu0
      %v1536 = vpop.f32.mrb[0].mxu0
      %v1537 = vadd.f32 0.0, %v1536
      %v1538 = vpop.f32.mrb[0].mxu0
      %1539 = vmatprep.mubr.bf16.mxu0 0
      %1540 = vmatmul.mubr.bf16.gmra.mrb[0].mxu0 %v1478
      %v1541 = vpop.f32.mrb[0].mxu0
      %v1542 = vadd.f32 0.0, %v1541
      %v1543 = vpop.f32.mrb[0].mxu0
      %v1544 = vpop.f32.mrb[0].mxu0
      %v1545 = vadd.f32 0.0, %v1544
      %v1546 = vpop.f32.mrb[0].mxu0
      %1547 = vdwg.mxu0
      %v1548 = vadd.f32 %v1429, %v1518
      %v1549 = vadd.f32 %v1430, %v1521
      %v1550 = vadd.f32 %v1431, %v1526
      %v1551 = vadd.f32 %v1432, %v1529
      %v1552 = vadd.f32 %v1433, %v1534
      %v1553 = vadd.f32 %v1434, %v1537
      %v1554 = vadd.f32 %v1435, %v1542
      %v1555 = vadd.f32 %v1436, %v1545
      %v1556 = vld [vmem:[%s1437] sm:$0xf]
      %v1557 = vld [vmem:[%s1437 + $0x4] sm:$0x1]
      %v1558 = vld [vmem:[%s1437 + $0x8] sm:$0xf]
      %v1559 = vld [vmem:[%s1437 + $0xc] sm:$0x1]
      %v1560 = vld [vmem:[%s1437 + $0x10] sm:$0xf]
      %v1561 = vld [vmem:[%s1437 + $0x14] sm:$0x1]
      %v1562 = vld [vmem:[%s1437 + $0x18] sm:$0xf]
      %v1563 = vld [vmem:[%s1437 + $0x1c] sm:$0x1]
      %v1564 = vld [vmem:[%s1437 + $0x20] sm:$0xf]
      %v1565 = vld [vmem:[%s1437 + $0x24] sm:$0x1]
      %v1566 = vld [vmem:[%s1437 + $0x28] sm:$0xf]
      %v1567 = vld [vmem:[%s1437 + $0x2c] sm:$0x1]
      %v1568 = vld [vmem:[%s1437 + $0x30] sm:$0xf]
      %v1569 = vld [vmem:[%s1437 + $0x34] sm:$0x1]
      %v1570 = vld [vmem:[%s1437 + $0x38] sm:$0xf]
      %v1571 = vld [vmem:[%s1437 + $0x3c] sm:$0x1]
      %v1573 = vshrl.u32 %v1556, 16
      %v1575 = vrot.slane %v1573, 4
      %v1576 = vshll.u32 %v1556, 16
      %v1578 = vrot.slane %v1576, 5
      %v1579 = vor.u32 %v1575, %v1578
      %v1580 = vrot.slane %v1579, 4
      %v1582 = vshll.u32 %v1557, 16
      %v1584 = vrot.slane %v1582, 5
      %v1585 = vsel %vm554, %v1580, %v1584
      %v1587 = vshrl.u32 %v1558, 16
      %v1589 = vrot.slane %v1587, 4
      %v1590 = vshll.u32 %v1558, 16
      %v1592 = vrot.slane %v1590, 5
      %v1593 = vor.u32 %v1589, %v1592
      %v1594 = vrot.slane %v1593, 4
      %v1596 = vshll.u32 %v1559, 16
      %v1598 = vrot.slane %v1596, 5
      %v1599 = vsel %vm554, %v1594, %v1598
      %v1601 = vshrl.u32 %v1560, 16
      %v1603 = vrot.slane %v1601, 4
      %v1604 = vshll.u32 %v1560, 16
      %v1606 = vrot.slane %v1604, 5
      %v1607 = vor.u32 %v1603, %v1606
      %v1608 = vrot.slane %v1607, 4
      %v1610 = vshll.u32 %v1561, 16
      %v1612 = vrot.slane %v1610, 5
      %v1613 = vsel %vm554, %v1608, %v1612
      %v1615 = vshrl.u32 %v1562, 16
      %v1617 = vrot.slane %v1615, 4
      %v1618 = vshll.u32 %v1562, 16
      %v1620 = vrot.slane %v1618, 5
      %v1621 = vor.u32 %v1617, %v1620
      %v1622 = vrot.slane %v1621, 4
      %v1624 = vshll.u32 %v1563, 16
      %v1626 = vrot.slane %v1624, 5
      %v1627 = vsel %vm554, %v1622, %v1626
      %v1629 = vshrl.u32 %v1564, 16
      %v1631 = vrot.slane %v1629, 4
      %v1632 = vshll.u32 %v1564, 16
      %v1634 = vrot.slane %v1632, 5
      %v1635 = vor.u32 %v1631, %v1634
      %v1636 = vrot.slane %v1635, 4
      %v1638 = vshll.u32 %v1565, 16
      %v1640 = vrot.slane %v1638, 5
      %v1641 = vsel %vm554, %v1636, %v1640
      %v1643 = vshrl.u32 %v1566, 16
      %v1645 = vrot.slane %v1643, 4
      %v1646 = vshll.u32 %v1566, 16
      %v1648 = vrot.slane %v1646, 5
      %v1649 = vor.u32 %v1645, %v1648
      %v1650 = vrot.slane %v1649, 4
      %v1652 = vshll.u32 %v1567, 16
      %v1654 = vrot.slane %v1652, 5
      %v1655 = vsel %vm554, %v1650, %v1654
      %v1657 = vshrl.u32 %v1568, 16
      %v1659 = vrot.slane %v1657, 4
      %v1660 = vshll.u32 %v1568, 16
      %v1662 = vrot.slane %v1660, 5
      %v1663 = vor.u32 %v1659, %v1662
      %v1664 = vrot.slane %v1663, 4
      %v1666 = vshll.u32 %v1569, 16
      %v1668 = vrot.slane %v1666, 5
      %v1669 = vsel %vm554, %v1664, %v1668
      %v1671 = vshrl.u32 %v1570, 16
      %v1673 = vrot.slane %v1671, 4
      %v1674 = vshll.u32 %v1570, 16
      %v1676 = vrot.slane %v1674, 5
      %v1677 = vor.u32 %v1673, %v1676
      %v1678 = vrot.slane %v1677, 4
      %v1680 = vshll.u32 %v1571, 16
      %v1682 = vrot.slane %v1680, 5
      %v1683 = vsel %vm554, %v1678, %v1682
      %s1684 = scalar_lea.vmem %s292, 28
      %v1685 = vld [vmem:[%s1684] sm:$0xf]
      %v1686 = vunpack.c.l.b16 %v1585
      %v1687 = vunpack.c.l.b16 %v1599
      %v1688 = vunpack.c.l.b16 %v1613
      %v1689 = vunpack.c.l.b16 %v1627
      %v1690 = vunpack.c.l.b16 %v1641
      %v1691 = vunpack.c.l.b16 %v1655
      %v1692 = vunpack.c.l.b16 %v1669
      %v1693 = vunpack.c.l.b16 %v1683
      %v1694 = vpack.c.b16 %v1687, %v1686
      %v1695 = vpack.c.b16 %v1689, %v1688
      %v1696 = vpack.c.b16 %v1691, %v1690
      %v1697 = vpack.c.b16 %v1693, %v1692
      %v1699 = vsel %vm352, %v1694, 0
      %v1702 = vsel %vm352, %v1695, 0
      %v1705 = vsel %vm352, %v1696, 0
      %v1708 = vsel %vm352, %v1697, 0
      %v1711 = vsel %vm365, %v1685, 0
      %1713 = vmatprep.subr.bf16.mxu0 0
      %1714 = vmatpush1.bf16.msra.mxu0 %v1711
      %1715 = vmatprep.subr.bf16.mxu0 0
      %1716 = vmatpush1.bf16.msra.mxu0 0
      %1717 = vmatprep.subr.bf16.mxu0 0
      %1718 = vmatpush1.bf16.msra.mxu0 0
      %1719 = vmatprep.subr.bf16.mxu0 0
      %1720 = vmatpush1.bf16.msra.mxu0 0
      %1721 = vmatprep.subr.bf16.mxu0 0
      %1722 = vmatpush1.bf16.msra.mxu0 0
      %1723 = vmatprep.subr.bf16.mxu0 0
      %1724 = vmatpush1.bf16.msra.mxu0 0
      %1725 = vmatprep.subr.bf16.mxu0 0
      %1726 = vmatpush1.bf16.msra.mxu0 0
      %1727 = vmatprep.subr.bf16.mxu0 0
      %1728 = vmatpush1.bf16.msra.mxu0 0
      %1729 = vmatprep.subr.bf16.mxu0 0
      %1730 = vmatpush1.bf16.msra.mxu0 0
      %1731 = vmatprep.subr.bf16.mxu0 0
      %1732 = vmatpush1.bf16.msra.mxu0 0
      %1733 = vmatprep.subr.bf16.mxu0 0
      %1734 = vmatpush1.bf16.msra.mxu0 0
      %1735 = vmatprep.subr.bf16.mxu0 0
      %1736 = vmatpush1.bf16.msra.mxu0 0
      %1737 = vmatprep.subr.bf16.mxu0 0
      %1738 = vmatpush1.bf16.msra.mxu0 0
      %1739 = vmatprep.subr.bf16.mxu0 0
      %1740 = vmatpush1.bf16.msra.mxu0 0
      %1741 = vmatprep.subr.bf16.mxu0 0
      %1742 = vmatpush1.bf16.msra.mxu0 0
      %1743 = vmatprep.subr.bf16.mxu0 0
      %1744 = vmatpush1.bf16.msra.mxu0 0
      %1745 = vmatprep.mubr.bf16.mxu0 0
      %1746 = vmatmul.mubr.bf16.gmra.mrb[0].mxu0 %v1699
      %v1747 = vpop.f32.mrb[0].mxu0
      %v1748 = vadd.f32 0.0, %v1747
      %v1749 = vpop.f32.mrb[0].mxu0
      %v1750 = vpop.f32.mrb[0].mxu0
      %v1751 = vadd.f32 0.0, %v1750
      %v1752 = vpop.f32.mrb[0].mxu0
      %1753 = vmatprep.mubr.bf16.mxu0 0
      %1754 = vmatmul.mubr.bf16.gmra.mrb[0].mxu0 %v1702
      %v1755 = vpop.f32.mrb[0].mxu0
      %v1756 = vadd.f32 0.0, %v1755
      %v1757 = vpop.f32.mrb[0].mxu0
      %v1758 = vpop.f32.mrb[0].mxu0
      %v1759 = vadd.f32 0.0, %v1758
      %v1760 = vpop.f32.mrb[0].mxu0
      %1761 = vmatprep.mubr.bf16.mxu0 0
      %1762 = vmatmul.mubr.bf16.gmra.mrb[0].mxu0 %v1705
      %v1763 = vpop.f32.mrb[0].mxu0
      %v1764 = vadd.f32 0.0, %v1763
      %v1765 = vpop.f32.mrb[0].mxu0
      %v1766 = vpop.f32.mrb[0].mxu0
      %v1767 = vadd.f32 0.0, %v1766
      %v1768 = vpop.f32.mrb[0].mxu0
      %1769 = vmatprep.mubr.bf16.mxu0 0
      %1770 = vmatmul.mubr.bf16.gmra.mrb[0].mxu0 %v1708
      %v1771 = vpop.f32.mrb[0].mxu0
      %v1772 = vadd.f32 0.0, %v1771
      %v1773 = vpop.f32.mrb[0].mxu0
      %v1774 = vpop.f32.mrb[0].mxu0
      %v1775 = vadd.f32 0.0, %v1774
      %v1776 = vpop.f32.mrb[0].mxu0
      %1777 = vdwg.mxu0
      %v1778 = vadd.f32 %v1548, %v1748
      %v1779 = vadd.f32 %v1549, %v1751
      %v1780 = vadd.f32 %v1550, %v1756
      %v1781 = vadd.f32 %v1551, %v1759
      %v1782 = vadd.f32 %v1552, %v1764
      %v1783 = vadd.f32 %v1553, %v1767
      %v1784 = vadd.f32 %v1554, %v1772
      %v1785 = vadd.f32 %v1555, %v1775
      %v1786 = vld [vmem:[%s1437] sm:$0xe]
      %v1787 = vld [vmem:[%s1437 + $0x8] sm:$0xe]
      %v1788 = vld [vmem:[%s1437 + $0x10] sm:$0xe]
      %v1789 = vld [vmem:[%s1437 + $0x18] sm:$0xe]
      %v1790 = vld [vmem:[%s1437 + $0x20] sm:$0xe]
      %v1791 = vld [vmem:[%s1437 + $0x28] sm:$0xe]
      %v1792 = vld [vmem:[%s1437 + $0x30] sm:$0xe]
      %v1793 = vld [vmem:[%s1437 + $0x38] sm:$0xe]
      %v1810 = vrot.slane %v1786, 5
      %v1811 = vrot.slane %v1810, 4
      %v1812 = vrot.slane %v1557, 5
      %v1813 = vsel %vm795, %v1811, %v1812
      %v1814 = vrot.slane %v1787, 5
      %v1815 = vrot.slane %v1814, 4
      %v1816 = vrot.slane %v1559, 5
      %v1817 = vsel %vm795, %v1815, %v1816
      %v1818 = vrot.slane %v1788, 5
      %v1819 = vrot.slane %v1818, 4
      %v1820 = vrot.slane %v1561, 5
      %v1821 = vsel %vm795, %v1819, %v1820
      %v1822 = vrot.slane %v1789, 5
      %v1823 = vrot.slane %v1822, 4
      %v1824 = vrot.slane %v1563, 5
      %v1825 = vsel %vm795, %v1823, %v1824
      %v1826 = vrot.slane %v1790, 5
      %v1827 = vrot.slane %v1826, 4
      %v1828 = vrot.slane %v1565, 5
      %v1829 = vsel %vm795, %v1827, %v1828
      %v1830 = vrot.slane %v1791, 5
      %v1831 = vrot.slane %v1830, 4
      %v1832 = vrot.slane %v1567, 5
      %v1833 = vsel %vm795, %v1831, %v1832
      %v1834 = vrot.slane %v1792, 5
      %v1835 = vrot.slane %v1834, 4
      %v1836 = vrot.slane %v1569, 5
      %v1837 = vsel %vm795, %v1835, %v1836
      %v1838 = vrot.slane %v1793, 5
      %v1839 = vrot.slane %v1838, 4
      %v1840 = vrot.slane %v1571, 5
      %v1841 = vsel %vm795, %v1839, %v1840
      %s1842 = scalar_lea.vmem %s292, 32
      %v1843 = vld [vmem:[%s1842] sm:$0xf]
      %v1844 = vunpack.c.l.b16 %v1813
      %v1845 = vunpack.c.l.b16 %v1817
      %v1846 = vunpack.c.l.b16 %v1821
      %v1847 = vunpack.c.l.b16 %v1825
      %v1848 = vunpack.c.l.b16 %v1829
      %v1849 = vunpack.c.l.b16 %v1833
      %v1850 = vunpack.c.l.b16 %v1837
      %v1851 = vunpack.c.l.b16 %v1841
      %v1852 = vpack.c.b16 %v1845, %v1844
      %v1853 = vpack.c.b16 %v1847, %v1846
      %v1854 = vpack.c.b16 %v1849, %v1848
      %v1855 = vpack.c.b16 %v1851, %v1850
      %v1857 = vsel %vm352, %v1852, 0
      %v1860 = vsel %vm352, %v1853, 0
      %v1863 = vsel %vm352, %v1854, 0
      %v1866 = vsel %vm352, %v1855, 0
      %v1869 = vsel %vm365, %v1843, 0
      %1871 = vmatprep.subr.bf16.mxu0 0
      %1872 = vmatpush1.bf16.msra.mxu0 %v1869
      %1873 = vmatprep.subr.bf16.mxu0 0
      %1874 = vmatpush1.bf16.msra.mxu0 0
      %1875 = vmatprep.subr.bf16.mxu0 0
      %1876 = vmatpush1.bf16.msra.mxu0 0
      %1877 = vmatprep.subr.bf16.mxu0 0
      %1878 = vmatpush1.bf16.msra.mxu0 0
      %1879 = vmatprep.subr.bf16.mxu0 0
      %1880 = vmatpush1.bf16.msra.mxu0 0
      %1881 = vmatprep.subr.bf16.mxu0 0
      %1882 = vmatpush1.bf16.msra.mxu0 0
      %1883 = vmatprep.subr.bf16.mxu0 0
      %1884 = vmatpush1.bf16.msra.mxu0 0
      %1885 = vmatprep.subr.bf16.mxu0 0
      %1886 = vmatpush1.bf16.msra.mxu0 0
      %1887 = vmatprep.subr.bf16.mxu0 0
      %1888 = vmatpush1.bf16.msra.mxu0 0
      %1889 = vmatprep.subr.bf16.mxu0 0
      %1890 = vmatpush1.bf16.msra.mxu0 0
      %1891 = vmatprep.subr.bf16.mxu0 0
      %1892 = vmatpush1.bf16.msra.mxu0 0
      %1893 = vmatprep.subr.bf16.mxu0 0
      %1894 = vmatpush1.bf16.msra.mxu0 0
      %1895 = vmatprep.subr.bf16.mxu0 0
      %1896 = vmatpush1.bf16.msra.mxu0 0
      %1897 = vmatprep.subr.bf16.mxu0 0
      %1898 = vmatpush1.bf16.msra.mxu0 0
      %1899 = vmatprep.subr.bf16.mxu0 0
      %1900 = vmatpush1.bf16.msra.mxu0 0
      %1901 = vmatprep.subr.bf16.mxu0 0
      %1902 = vmatpush1.bf16.msra.mxu0 0
      %1903 = vmatprep.mubr.bf16.mxu0 0
      %1904 = vmatmul.mubr.bf16.gmra.mrb[0].mxu0 %v1857
      %v1905 = vpop.f32.mrb[0].mxu0
      %v1906 = vadd.f32 0.0, %v1905
      %v1907 = vpop.f32.mrb[0].mxu0
      %v1908 = vpop.f32.mrb[0].mxu0
      %v1909 = vadd.f32 0.0, %v1908
      %v1910 = vpop.f32.mrb[0].mxu0
      %1911 = vmatprep.mubr.bf16.mxu0 0
      %1912 = vmatmul.mubr.bf16.gmra.mrb[0].mxu0 %v1860
      %v1913 = vpop.f32.mrb[0].mxu0
      %v1914 = vadd.f32 0.0, %v1913
      %v1915 = vpop.f32.mrb[0].mxu0
      %v1916 = vpop.f32.mrb[0].mxu0
      %v1917 = vadd.f32 0.0, %v1916
      %v1918 = vpop.f32.mrb[0].mxu0
      %1919 = vmatprep.mubr.bf16.mxu0 0
      %1920 = vmatmul.mubr.bf16.gmra.mrb[0].mxu0 %v1863
      %v1921 = vpop.f32.mrb[0].mxu0
      %v1922 = vadd.f32 0.0, %v1921
      %v1923 = vpop.f32.mrb[0].mxu0
      %v1924 = vpop.f32.mrb[0].mxu0
      %v1925 = vadd.f32 0.0, %v1924
      %v1926 = vpop.f32.mrb[0].mxu0
      %1927 = vmatprep.mubr.bf16.mxu0 0
      %1928 = vmatmul.mubr.bf16.gmra.mrb[0].mxu0 %v1866
      %v1929 = vpop.f32.mrb[0].mxu0
      %v1930 = vadd.f32 0.0, %v1929
      %v1931 = vpop.f32.mrb[0].mxu0
      %v1932 = vpop.f32.mrb[0].mxu0
      %v1933 = vadd.f32 0.0, %v1932
      %v1934 = vpop.f32.mrb[0].mxu0
      %1935 = vdwg.mxu0
      %v1936 = vadd.f32 %v1778, %v1906
      %v1937 = vadd.f32 %v1779, %v1909
      %v1938 = vadd.f32 %v1780, %v1914
      %v1939 = vadd.f32 %v1781, %v1917
      %v1940 = vadd.f32 %v1782, %v1922
      %v1941 = vadd.f32 %v1783, %v1925
      %v1942 = vadd.f32 %v1784, %v1930
      %v1943 = vadd.f32 %v1785, %v1933
      %v1944 = vld [vmem:[%s295] sm:$0x1]
      %v1946 = vlaneseq
      %v1947 = vshrl.u32 %v1946, 7
      %v1948 = vsub.s32 0, %v1947
      %v1949 = vrot.slane %v1944, %v1948
      %v1951 = vadd.f32 %v1936, %v1949
      %v1952 = vadd.f32 %v1937, %v1949
      %v1953 = vadd.f32 %v1938, %v1949
      %v1954 = vadd.f32 %v1939, %v1949
      %v1955 = vadd.f32 %v1940, %v1949
      %v1956 = vadd.f32 %v1941, %v1949
      %v1957 = vadd.f32 %v1942, %v1949
      %v1958 = vadd.f32 %v1943, %v1949
      %v1959 = vmax.f32 %v1951, 0.0
      %v1960 = vmax.f32 %v1952, 0.0
      %v1961 = vmax.f32 %v1953, 0.0
      %v1962 = vmax.f32 %v1954, 0.0
      %v1963 = vmax.f32 %v1955, 0.0
      %v1964 = vmax.f32 %v1956, 0.0
      %v1965 = vmax.f32 %v1957, 0.0
      %v1966 = vmax.f32 %v1958, 0.0
      %1967 = vst.msk [vmem:[%s312] sm:$0xff] %vm352, %v1959
      %1968 = vst.msk [vmem:[%s312 + $0x8] sm:$0xff] %vm352, %v1960
      %1969 = vst.msk [vmem:[%s312 + $0x10] sm:$0xff] %vm352, %v1961
      %1970 = vst.msk [vmem:[%s312 + $0x18] sm:$0xff] %vm352, %v1962
      %1971 = vst.msk [vmem:[%s312 + $0x20] sm:$0xff] %vm352, %v1963
      %1972 = vst.msk [vmem:[%s312 + $0x28] sm:$0xff] %vm352, %v1964
      %1973 = vst.msk [vmem:[%s312 + $0x30] sm:$0xff] %vm352, %v1965
      %1974 = vst.msk [vmem:[%s312 + $0x38] sm:$0xff] %vm352, %v1966
      %p1975 = scmp.lt.s32.totalorder %s20, 1
      %s1976 = scalar_select %p1975, %s20, 1
      %p1977 = scmp.lt.s32.totalorder %s21, 0
      %s1978 = scalar_select %p1977, %s21, 0
      %s1979 = smul.addr %s1976, 8
      %s1980 = sadd.s32 %s1978, %s1979
      %s1981 = smul.addr %s1980, 8
      %s1982 = scalar_lea.vmem %s5, %s1981
      // Predicated region
      $region41: #{basic_block_forward.3} parent=39 // pred_check
        %p1983 = pneg %p178
      $region42: #{basic_block_forward.3} parent=39 // pred_check_branch
        %1985 = sbr.rel (%p1983) target = $region44
      $region43: #{basic_block_forward.3} parent=39 // pred_region
        _
      $region44: #{basic_block_forward.3} parent=39 // pred_fallthru
        _
    $region40: #{basic_block_forward.3} parent=5 // pred_fallthru
      _
    %p1986 = scmp.le.s32.totalorder 2, %s11
    // Predicated region
    $region45: #{basic_block_forward.3} parent=5 // pred_check
      %p1987 = pneg %p1986
    $region46: #{basic_block_forward.3} parent=5 // pred_check_branch
      %1989 = sbr.rel (%p1987) target = $region48
    $region47: #{basic_block_forward.3} parent=5 // pred_region
      %s1990 = ssub.s32 %s11, 2
      // Predicated region
      $region49: #{basic_block_forward.3} parent=47 // pred_check
        %p1991 = pneg %p184
      $region50: #{basic_block_forward.3} parent=47 // pred_check_branch
        %1993 = sbr.rel (%p1991) target = $region52
      $region51: #{basic_block_forward.3} parent=47 // pred_region
        %p1994 = scmp.lt.s32.totalorder %s22, 1
        %s1995 = scalar_select %p1994, %s22, 1
        %p1996 = scmp.lt.s32.totalorder %s23, 0
        %s1997 = scalar_select %p1996, %s23, 0
        %s1998 = smul.addr %s1995, 8
        %s1999 = sadd.s32 %s1997, %s1998
        %s2000 = smul.addr %s1999, 8
        %s2001 = scalar_lea.vmem %s5, %s2000
      $region52: #{basic_block_forward.3} parent=47 // pred_fallthru
        _
    $region48: #{basic_block_forward.3} parent=5 // pred_fallthru
      _
  $region6: #{basic_block_forward.3} parent=0 // loop_footer
    %s15 = sadd.s32 1, %s11
  $region7: #{basic_block_forward.3} parent=0 // loop_footer_branch
    %10 = sbr.rel target = $region3
  $region8: #{basic_block_forward.3} parent=0 // loop_exit
    _

</llo_original>
